<compile_context>
chip_gen: v7x
topology: tpu7x:2x2x1
jax: 0.10.0
libtpu: 0.0.40
codegen_flags: <defaults>
</compile_context>

<pallas_src>
import math

import jax
import jax.numpy as jnp
from jax.experimental import pallas as pl
from jax.experimental.pallas import tpu as pltpu

_BN_EPS = 1e-5
_INV_BN = 1.0 / math.sqrt(1.0 + _BN_EPS)  # eval-mode BN: running_mean=0, running_var=1


def _decoder_kernel(
    # inputs
    emb_ref, eps_ref,
    w1_ref, w2_ref, wmusig_ref, enc_b_ref, musig_b_ref,
    beta_ref,
    half_wv_ref, half_wc_ref, half_vec_ref,
    wemb_ref, bn_beta_ref,
    # outputs
    musig_ref, wdist_ref, recon_ref,
    # scratch
    wd_bf, emb_bf,
):
    k = pl.program_id(0)

    @pl.when(k == 0)
    def _stage1():
        emb = emb_ref[...]

        # ---- ContextualInferenceNetwork (relu); dropout = identity (eval) ----
        x = jnp.dot(emb, w1_ref[...], preferred_element_type=jnp.float32) + enc_b_ref[0:1, :]
        x = jnp.maximum(x, 0.0)
        x = jnp.dot(x, w2_ref[...], preferred_element_type=jnp.float32) + enc_b_ref[1:2, :]
        x = jnp.maximum(x, 0.0)

        # fused mu|log_sigma projection; affine-free eval BN folded into the weights
        proj = jnp.dot(x, wmusig_ref[...], preferred_element_type=jnp.float32) + musig_b_ref[...]
        kdim = proj.shape[1] // 2
        mu = proj[:, :kdim]
        logsig = proj[:, kdim:]
        sigma = jnp.exp(logsig)
        musig_ref[0] = mu
        musig_ref[1] = sigma
        musig_ref[2] = logsig

        # ---- reparameterize + softmax -> theta (std = exp(0.5*logsig) = sqrt(sigma)) ----
        z = eps_ref[...] * jnp.sqrt(sigma) + mu
        z = z - jnp.max(z, axis=1, keepdims=True)
        ez = jnp.exp(z)
        theta = ez * pl.reciprocal(jnp.sum(ez, axis=1, keepdims=True), approx=True)

        # ---- word_dist = softmax(BN_noaffine(theta @ beta)); BN scale folded into beta ----
        wd = jnp.dot(theta.astype(jnp.bfloat16), beta_ref[...],
                     preferred_element_type=jnp.float32)
        wd = wd - jnp.max(wd, axis=1, keepdims=True)
        ew = jnp.exp(wd)
        word_dist = ew * pl.reciprocal(jnp.sum(ew, axis=1, keepdims=True), approx=True)
        wdist_ref[...] = word_dist

        # stash bf16 copies for the per-tile decoder matmuls
        wd_bf[...] = word_dist.astype(jnp.bfloat16)
        emb_bf[...] = emb.astype(jnp.bfloat16)
        # init recon accumulator with the output-BN bias (gamma/scale folded into wemb)
        recon_ref[...] = jnp.zeros_like(recon_ref) + bn_beta_ref[...]

    # ---- per-tile decoder (runs every grid step k over the 4V axis) ----
    # cat(word_dist, emb) @ W_tile  ==  word_dist @ Wv_tile + emb @ Wc_tile
    h = (jnp.dot(wd_bf[...], half_wv_ref[...], preferred_element_type=jnp.float32)
         + jnp.dot(emb_bf[...], half_wc_ref[...], preferred_element_type=jnp.float32)
         + half_vec_ref[...])          # fused (linear bias * BN scale + BN bias) tile
    h = jnp.tanh(h)
    recon_ref[...] += jnp.dot(h.astype(jnp.bfloat16), wemb_ref[...],
                              preferred_element_type=jnp.float32)


def _pick_tile(total, cap=512):
    """Largest multiple-of-128 divisor of `total` that is <= cap; fall back to full size."""
    best = total
    t = 128
    while t <= min(total, cap):
        if total % t == 0:
            best = t
        t += 128
    return best


def prepare_params(raw):
    """Fold eval-mode BatchNorm scales into weights/biases, pack small vectors,
    and cast the large matrices to bf16 for the MXU (f32 accumulation in-kernel)."""
    inv = jnp.float32(_INV_BN)
    V = raw["beta"].shape[1]

    enc_b = jnp.concatenate([raw["inf_b1"], raw["inf_b2"]], axis=0)          # (2, H)
    wmusig = jnp.concatenate([raw["mu_w"], raw["sig_w"]], axis=1) * inv      # (H, 2K)
    bmusig = jnp.concatenate([raw["mu_b"], raw["sig_b"]], axis=1) * inv      # (1, 2K)
    beta_s = (raw["beta"] * inv).astype(jnp.bfloat16)                        # (K, V)

    s = raw["half_gamma"] * inv                                              # (1, 4V)
    half_wv = (raw["half_w"][:V, :] * s).astype(jnp.bfloat16)                # (V, 4V)
    half_wc = (raw["half_w"][V:, :] * s).astype(jnp.bfloat16)                # (C, 4V)
    half_vec = raw["half_b"] * s + raw["half_beta"]                          # (1, 4V)

    wemb = (raw["word_embedding"] * (raw["bn_gamma"] * inv)).astype(jnp.bfloat16)  # (4V, V)
    bn_beta = raw["bn_beta"]                                                 # (1, V)

    return dict(
        inf_w1=raw["inf_w1"], inf_w2=raw["inf_w2"],
        wmusig=wmusig, enc_b=enc_b, bmusig=bmusig,
        beta=beta_s,
        half_wv=half_wv, half_wc=half_wc, half_vec=half_vec,
        wemb=wemb, bn_beta=bn_beta,
        prior_mean=raw["prior_mean"], prior_variance=raw["prior_variance"],
    )


def decoder_forward(emb, target, eps, params, *, tile_4v=None, interpret=False):
    """Fused DecoderNetwork forward. `target` accepted for API parity; like the reference
    ContextualInferenceNetwork it is not used."""
    del target
    emb = emb.astype(jnp.float32)
    eps = eps.astype(jnp.float32)
    B, C = emb.shape
    K = eps.shape[1]
    V = params["beta"].shape[1]
    F = params["half_wv"].shape[1]            # = 4V
    H = params["inf_w1"].shape[1]

    T = tile_4v if tile_4v is not None else _pick_tile(F)
    assert F % T == 0, "tile must divide the 4V decoder hidden dim"
    nk = F // T

    const2 = lambda k: (0, 0)

    in_specs = [
        pl.BlockSpec((B, C), const2),               # emb
        pl.BlockSpec((B, K), const2),               # eps
        pl.BlockSpec((C, H), const2),               # inf_w1
        pl.BlockSpec((H, H), const2),               # inf_w2
        pl.BlockSpec((H, 2 * K), const2),           # fused mu|sig weights (BN folded)
        pl.BlockSpec((2, H), const2),               # packed encoder biases
        pl.BlockSpec((1, 2 * K), const2),           # fused mu|sig bias (BN folded)
        pl.BlockSpec((K, V), const2),               # beta (bf16, BN folded)
        pl.BlockSpec((V, T), lambda k: (0, k)),     # half_w word-dist rows, tiled (bf16)
        pl.BlockSpec((C, T), lambda k: (0, k)),     # half_w emb rows, tiled (bf16)
        pl.BlockSpec((1, T), lambda k: (0, k)),     # fused decoder bias, tiled
        pl.BlockSpec((T, V), lambda k: (k, 0)),     # word_embedding, tiled (bf16, BN folded)
        pl.BlockSpec((1, V), const2),               # output BN bias
    ]
    out_shapes = (
        jax.ShapeDtypeStruct((3, B, K), jnp.float32),   # [mu, sigma, log_sigma]
        jax.ShapeDtypeStruct((B, V), jnp.float32),      # word_dist
        jax.ShapeDtypeStruct((B, V), jnp.float32),      # recon_dist
    )
    out_specs = [
        pl.BlockSpec((3, B, K), lambda k: (0, 0, 0)),
        pl.BlockSpec((B, V), const2),
        pl.BlockSpec((B, V), const2),
    ]

    musig, word_dist, recon = pl.pallas_call(
        _decoder_kernel,
        out_shape=out_shapes,
        grid_spec=pltpu.PrefetchScalarGridSpec(
            num_scalar_prefetch=0,
            grid=(nk,),
            in_specs=in_specs,
            out_specs=out_specs,
            scratch_shapes=[
                pltpu.VMEM((B, V), jnp.bfloat16),   # word_dist (bf16) reused across k
                pltpu.VMEM((B, C), jnp.bfloat16),   # emb (bf16) reused across k
            ],
        ),
        compiler_params=pltpu.CompilerParams(
            dimension_semantics=("arbitrary",),     # recon accumulates across k
            vmem_limit_bytes=64 * 1024 * 1024,
        ),
        interpret=interpret,
    )(
        emb, eps,
        params["inf_w1"], params["inf_w2"], params["wmusig"],
        params["enc_b"], params["bmusig"],
        params["beta"],
        params["half_wv"], params["half_wc"], params["half_vec"],
        params["wemb"], params["bn_beta"],
    )

    mu, sigma, log_sigma = musig[0], musig[1], musig[2]
    return (params["prior_mean"], params["prior_variance"],
            mu, sigma, log_sigma, word_dist, recon)


def decoder_forward_ref(emb, eps, prep):
    """Pure-JAX reference using the same folded/casted params (for validation)."""
    f32 = jnp.float32
    x = jnp.maximum(emb @ prep["inf_w1"] + prep["enc_b"][0:1], 0.0)
    x = jnp.maximum(x @ prep["inf_w2"] + prep["enc_b"][1:2], 0.0)
    proj = x @ prep["wmusig"] + prep["bmusig"]
    K = proj.shape[1] // 2
    mu, logsig = proj[:, :K], proj[:, K:]
    sigma = jnp.exp(logsig)
    z = eps * jnp.sqrt(sigma) + mu
    theta = jax.nn.softmax(z, axis=1)
    wd = theta.astype(jnp.bfloat16).astype(f32) @ prep["beta"].astype(f32)
    word_dist = jax.nn.softmax(wd, axis=1)
    wd_bf = word_dist.astype(jnp.bfloat16).astype(f32)
    emb_bf = emb.astype(jnp.bfloat16).astype(f32)
    h = jnp.tanh(wd_bf @ prep["half_wv"].astype(f32)
                 + emb_bf @ prep["half_wc"].astype(f32)
                 + prep["half_vec"])
    recon = h.astype(jnp.bfloat16).astype(f32) @ prep["wemb"].astype(f32) + prep["bn_beta"]
    return mu, sigma, logsig, word_dist, recon


def init_params(key, vocab_size, contextual_size, n_components, hidden):
    """Raw PyTorch-style parameter init (Linear weights stored pre-transposed as (in, out))."""
    V, C, K, H = vocab_size, contextual_size, n_components, hidden
    ks = jax.random.split(key, 8)

    def lin(k, fan_in, fan_out):
        bound = 1.0 / math.sqrt(fan_in)
        kw, kb = jax.random.split(k)
        w = jax.random.uniform(kw, (fan_in, fan_out), jnp.float32, -bound, bound)
        b = jax.random.uniform(kb, (1, fan_out), jnp.float32, -bound, bound)
        return w, b

    inf_w1, inf_b1 = lin(ks[0], C, H)
    inf_w2, inf_b2 = lin(ks[1], H, H)
    mu_w, mu_b = lin(ks[2], H, K)
    sig_w, sig_b = lin(ks[3], H, K)

    a = math.sqrt(6.0 / (K + V))                     # xavier_uniform for beta
    beta = jax.random.uniform(ks[4], (K, V), jnp.float32, -a, a)

    half_w, half_b = lin(ks[5], V + C, 4 * V)        # half_decoder_tanh linear
    word_embedding = jax.random.normal(ks[6], (4 * V, V), jnp.float32)  # torch.randn

    return dict(
        inf_w1=inf_w1, inf_b1=inf_b1, inf_w2=inf_w2, inf_b2=inf_b2,
        mu_w=mu_w, mu_b=mu_b, sig_w=sig_w, sig_b=sig_b,
        beta=beta,
        half_w=half_w, half_b=half_b,
        half_gamma=jnp.ones((1, 4 * V), jnp.float32),   # BatchNorm1d(4V) affine init
        half_beta=jnp.zeros((1, 4 * V), jnp.float32),
        word_embedding=word_embedding,
        bn_gamma=jnp.ones((1, V), jnp.float32),          # self.batch_norm(V) affine init
        bn_beta=jnp.zeros((1, V), jnp.float32),
        prior_mean=jnp.zeros((K,), jnp.float32),
        prior_variance=jnp.full((K,), 1.0 - 1.0 / K, jnp.float32),
    )


if __name__ == "__main__":
    # batch, vocab, contextual, hidden, n_components (small but lane-dense: V multiple of 128)
    B, V, C, H, K = 8, 128, 64, 128, 16

    key = jax.random.PRNGKey(0)
    k_emb, k_tgt, k_eps, k_par = jax.random.split(key, 4)

    emb = jax.random.normal(k_emb, (B, C), jnp.float32)       # contextual embeddings
    target = jax.random.uniform(k_tgt, (B, V), jnp.float32)   # BoW target (unused by inf_net)
    eps = jax.random.normal(k_eps, (B, K), jnp.float32)       # reparameterization noise

    raw = init_params(k_par, V, C, K, H)
    prep = prepare_params(raw)

    # tile_4v=128 -> 4 pipelined grid steps over the 4V=512 decoder hidden axis
    outs = decoder_forward(emb, target, eps, prep, tile_4v=128)
    outs = jax.block_until_ready(outs)
    prior_mean, prior_var, mu, sigma, log_sigma, word_dist, recon = outs

    assert mu.shape == (B, K) and sigma.shape == (B, K) and log_sigma.shape == (B, K)
    assert word_dist.shape == (B, V) and recon.shape == (B, V)
    assert bool(jnp.all(jnp.isfinite(word_dist))) and bool(jnp.all(jnp.isfinite(recon)))
    assert bool(jnp.allclose(jnp.sum(word_dist, axis=1), 1.0, atol=1e-2))

    r_mu, r_sigma, r_logsig, r_wd, r_recon = decoder_forward_ref(emb, eps, prep)
    assert bool(jnp.allclose(mu, r_mu, atol=5e-2, rtol=5e-2))
    assert bool(jnp.allclose(sigma, r_sigma, atol=5e-2, rtol=5e-2))
    assert bool(jnp.allclose(log_sigma, r_logsig, atol=5e-2, rtol=5e-2))
    assert bool(jnp.allclose(word_dist, r_wd, atol=5e-2, rtol=5e-2))
    assert bool(jnp.allclose(recon, r_recon, atol=1e-1, rtol=5e-2))

    print("KERNEL_OK")
</pallas_src>

<mosaic_0001>
module attributes {stable_mosaic.version = 11 : i64} {
  func.func @_decoder_kernel(%arg0: i32, %arg1: memref<8x64xf32, #tpu.memory_space<vmem>>, %arg2: memref<8x16xf32, #tpu.memory_space<vmem>>, %arg3: memref<64x128xf32, #tpu.memory_space<vmem>>, %arg4: memref<128x128xf32, #tpu.memory_space<vmem>>, %arg5: memref<128x32xf32, #tpu.memory_space<vmem>>, %arg6: memref<2x128xf32, #tpu.memory_space<vmem>>, %arg7: memref<1x32xf32, #tpu.memory_space<vmem>>, %arg8: memref<16x128xbf16, #tpu.memory_space<vmem>>, %arg9: memref<128x128xbf16, #tpu.memory_space<vmem>>, %arg10: memref<64x128xbf16, #tpu.memory_space<vmem>>, %arg11: memref<1x128xf32, #tpu.memory_space<vmem>>, %arg12: memref<128x128xbf16, #tpu.memory_space<vmem>>, %arg13: memref<1x128xf32, #tpu.memory_space<vmem>>, %arg14: memref<3x8x16xf32, #tpu.memory_space<vmem>>, %arg15: memref<8x128xf32, #tpu.memory_space<vmem>>, %arg16: memref<8x128xf32, #tpu.memory_space<vmem>>, %arg17: memref<8x128xbf16, #tpu.memory_space<vmem>>, %arg18: memref<8x64xbf16, #tpu.memory_space<vmem>>) attributes {dimension_semantics = [#tpu.dimension_semantics<arbitrary>], iteration_bounds = array<i64: 4>, scalar_prefetch = 0 : i64, scratch_operands = 2 : i64, tpu.core_type = #tpu.core_type<tc>, window_params = [{pipeline_mode = #tpu.pipeline_mode<synchronous>, transform_indices = @transform_0, window_bounds = array<i64: 8, 64>}, {pipeline_mode = #tpu.pipeline_mode<synchronous>, transform_indices = @transform_1, window_bounds = array<i64: 8, 16>}, {pipeline_mode = #tpu.pipeline_mode<synchronous>, transform_indices = @transform_2, window_bounds = array<i64: 64, 128>}, {pipeline_mode = #tpu.pipeline_mode<synchronous>, transform_indices = @transform_3, window_bounds = array<i64: 128, 128>}, {pipeline_mode = #tpu.pipeline_mode<synchronous>, transform_indices = @transform_4, window_bounds = array<i64: 128, 32>}, {pipeline_mode = #tpu.pipeline_mode<synchronous>, transform_indices = @transform_5, window_bounds = array<i64: 2, 128>}, {pipeline_mode = #tpu.pipeline_mode<synchronous>, transform_indices = @transform_6, window_bounds = array<i64: 1, 32>}, {pipeline_mode = #tpu.pipeline_mode<synchronous>, transform_indices = @transform_7, window_bounds = array<i64: 16, 128>}, {transform_indices = @transform_8, window_bounds = array<i64: 128, 128>}, {transform_indices = @transform_9, window_bounds = array<i64: 64, 128>}, {transform_indices = @transform_10, window_bounds = array<i64: 1, 128>}, {transform_indices = @transform_11, window_bounds = array<i64: 128, 128>}, {pipeline_mode = #tpu.pipeline_mode<synchronous>, transform_indices = @transform_12, window_bounds = array<i64: 1, 128>}, {pipeline_mode = #tpu.pipeline_mode<synchronous>, transform_indices = @transform_13, window_bounds = array<i64: 3, 8, 16>}, {pipeline_mode = #tpu.pipeline_mode<synchronous>, transform_indices = @transform_14, window_bounds = array<i64: 8, 128>}, {pipeline_mode = #tpu.pipeline_mode<synchronous>, transform_indices = @transform_15, window_bounds = array<i64: 8, 128>}]} {
    %c0_i32 = arith.constant 0 : i32
    %0 = arith.cmpi eq, %arg0, %c0_i32 : i32
    %1 = arith.extui %0 : i1 to i32
    %c0_i32_0 = arith.constant 0 : i32
    %2 = arith.cmpi ne, %1, %c0_i32_0 : i32
    scf.if %2 {
      %c0_18 = arith.constant 0 : index
      %c0_19 = arith.constant 0 : index
      %20 = vector.load %arg1[%c0_18, %c0_19] : memref<8x64xf32, #tpu.memory_space<vmem>>, vector<8x64xf32>
      %c0_20 = arith.constant 0 : index
      %c0_21 = arith.constant 0 : index
      %21 = vector.load %arg3[%c0_20, %c0_21] : memref<64x128xf32, #tpu.memory_space<vmem>>, vector<64x128xf32>
      %cst_22 = arith.constant dense<0.000000e+00> : vector<8x128xf32>
      %22 = tpu.matmul %20, %21, %cst_22 {dimension_numbers = #tpu.dot_dimension_numbers<[1], [0], [0], [1], [0, 0, 1, 1], [], []>} : vector<8x64xf32>, vector<64x128xf32>, vector<8x128xf32> -> vector<8x128xf32>
      %c0_23 = arith.constant 0 : index
      %c0_24 = arith.constant 0 : index
      %23 = vector.load %arg6[%c0_23, %c0_24] : memref<2x128xf32, #tpu.memory_space<vmem>>, vector<1x128xf32>
      %24 = vector.broadcast %23 : vector<1x128xf32> to vector<8x128xf32>
      %25 = arith.addf %22, %24 : vector<8x128xf32>
      %cst_25 = arith.constant 0.000000e+00 : f32
      %26 = vector.broadcast %cst_25 : f32 to vector<8x128xf32>
      %27 = arith.maximumf %25, %26 : vector<8x128xf32>
      %c0_26 = arith.constant 0 : index
      %c0_27 = arith.constant 0 : index
      %28 = vector.load %arg4[%c0_26, %c0_27] : memref<128x128xf32, #tpu.memory_space<vmem>>, vector<128x128xf32>
      %cst_28 = arith.constant dense<0.000000e+00> : vector<8x128xf32>
      %29 = tpu.matmul %27, %28, %cst_28 {dimension_numbers = #tpu.dot_dimension_numbers<[1], [0], [0], [1], [0, 0, 1, 1], [], []>} : vector<8x128xf32>, vector<128x128xf32>, vector<8x128xf32> -> vector<8x128xf32>
      %c1 = arith.constant 1 : index
      %c0_29 = arith.constant 0 : index
      %30 = vector.load %arg6[%c1, %c0_29] : memref<2x128xf32, #tpu.memory_space<vmem>>, vector<1x128xf32>
      %31 = vector.broadcast %30 : vector<1x128xf32> to vector<8x128xf32>
      %32 = arith.addf %29, %31 : vector<8x128xf32>
      %cst_30 = arith.constant 0.000000e+00 : f32
      %33 = vector.broadcast %cst_30 : f32 to vector<8x128xf32>
      %34 = arith.maximumf %32, %33 : vector<8x128xf32>
      %c0_31 = arith.constant 0 : index
      %c0_32 = arith.constant 0 : index
      %35 = vector.load %arg5[%c0_31, %c0_32] : memref<128x32xf32, #tpu.memory_space<vmem>>, vector<128x32xf32>
      %cst_33 = arith.constant dense<0.000000e+00> : vector<8x32xf32>
      %36 = tpu.matmul %34, %35, %cst_33 {dimension_numbers = #tpu.dot_dimension_numbers<[1], [0], [0], [1], [0, 0, 1, 1], [], []>} : vector<8x128xf32>, vector<128x32xf32>, vector<8x32xf32> -> vector<8x32xf32>
      %c0_34 = arith.constant 0 : index
      %c0_35 = arith.constant 0 : index
      %37 = vector.load %arg7[%c0_34, %c0_35] : memref<1x32xf32, #tpu.memory_space<vmem>>, vector<1x32xf32>
      %38 = vector.broadcast %37 : vector<1x32xf32> to vector<8x32xf32>
      %39 = arith.addf %36, %38 : vector<8x32xf32>
      %40 = vector.extract_strided_slice %39 {offsets = [0, 0], sizes = [8, 16], strides = [1, 1]} : vector<8x32xf32> to vector<8x16xf32>
      %41 = vector.extract_strided_slice %39 {offsets = [0, 16], sizes = [8, 16], strides = [1, 1]} : vector<8x32xf32> to vector<8x16xf32>
      %42 = math.exp %41 : vector<8x16xf32>
      %c0_36 = arith.constant 0 : index
      %c0_37 = arith.constant 0 : index
      %c0_38 = arith.constant 0 : index
      %43 = vector.load %arg14[%c0_36, %c0_37, %c0_38] : memref<3x8x16xf32, #tpu.memory_space<vmem>>, vector<1x8x16xf32>
      %44 = vector.shape_cast %43 : vector<1x8x16xf32> to vector<8x16xf32>
      %45 = vector.shape_cast %40 : vector<8x16xf32> to vector<1x8x16xf32>
      tpu.vector_store %arg14[%c0_36, %c0_37, %c0_38], %45 {strides = array<i32>} : memref<3x8x16xf32, #tpu.memory_space<vmem>>, vector<1x8x16xf32>,
      %c1_39 = arith.constant 1 : index
      %c0_40 = arith.constant 0 : index
      %c0_41 = arith.constant 0 : index
      %46 = vector.load %arg14[%c1_39, %c0_40, %c0_41] : memref<3x8x16xf32, #tpu.memory_space<vmem>>, vector<1x8x16xf32>
      %47 = vector.shape_cast %46 : vector<1x8x16xf32> to vector<8x16xf32>
      %48 = vector.shape_cast %42 : vector<8x16xf32> to vector<1x8x16xf32>
      tpu.vector_store %arg14[%c1_39, %c0_40, %c0_41], %48 {strides = array<i32>} : memref<3x8x16xf32, #tpu.memory_space<vmem>>, vector<1x8x16xf32>,
      %c2 = arith.constant 2 : index
      %c0_42 = arith.constant 0 : index
      %c0_43 = arith.constant 0 : index
      %49 = vector.load %arg14[%c2, %c0_42, %c0_43] : memref<3x8x16xf32, #tpu.memory_space<vmem>>, vector<1x8x16xf32>
      %50 = vector.shape_cast %49 : vector<1x8x16xf32> to vector<8x16xf32>
      %51 = vector.shape_cast %41 : vector<8x16xf32> to vector<1x8x16xf32>
      tpu.vector_store %arg14[%c2, %c0_42, %c0_43], %51 {strides = array<i32>} : memref<3x8x16xf32, #tpu.memory_space<vmem>>, vector<1x8x16xf32>,
      %c0_44 = arith.constant 0 : index
      %c0_45 = arith.constant 0 : index
      %52 = vector.load %arg2[%c0_44, %c0_45] : memref<8x16xf32, #tpu.memory_space<vmem>>, vector<8x16xf32>
      %53 = math.sqrt %42 : vector<8x16xf32>
      %54 = arith.mulf %52, %53 : vector<8x16xf32>
      %55 = arith.addf %54, %40 : vector<8x16xf32>
      %cst_46 = arith.constant dense<0xFF800000> : vector<8xf32>
      %56 = vector.multi_reduction <maximumf>, %55, %cst_46 [1] : vector<8x16xf32> to vector<8xf32>
      %57 = vector.shape_cast %56 : vector<8xf32> to vector<8x1xf32>
      %58 = vector.broadcast %57 : vector<8x1xf32> to vector<8x16xf32>
      %59 = arith.subf %55, %58 : vector<8x16xf32>
      %60 = math.exp %59 : vector<8x16xf32>
      %cst_47 = arith.constant dense<0.000000e+00> : vector<8xf32>
      %61 = vector.multi_reduction <add>, %60, %cst_47 [1] : vector<8x16xf32> to vector<8xf32>
      %62 = vector.shape_cast %61 : vector<8xf32> to vector<8x1xf32>
      %63 = tpu.reciprocal %62 {approx = true} : vector<8x1xf32> -> vector<8x1xf32>
      %64 = vector.broadcast %63 : vector<8x1xf32> to vector<8x16xf32>
      %65 = arith.mulf %60, %64 : vector<8x16xf32>
      %66 = arith.truncf %65 : vector<8x16xf32> to vector<8x16xbf16>
      %c0_48 = arith.constant 0 : index
      %c0_49 = arith.constant 0 : index
      %67 = vector.load %arg8[%c0_48, %c0_49] : memref<16x128xbf16, #tpu.memory_space<vmem>>, vector<16x128xbf16>
      %cst_50 = arith.constant dense<0.000000e+00> : vector<8x128xf32>
      %68 = tpu.matmul %66, %67, %cst_50 {dimension_numbers = #tpu.dot_dimension_numbers<[1], [0], [0], [1], [0, 0, 1, 1], [], []>} : vector<8x16xbf16>, vector<16x128xbf16>, vector<8x128xf32> -> vector<8x128xf32>
      %cst_51 = arith.constant dense<0xFF800000> : vector<8xf32>
      %69 = vector.multi_reduction <maximumf>, %68, %cst_51 [1] : vector<8x128xf32> to vector<8xf32>
      %70 = vector.shape_cast %69 : vector<8xf32> to vector<8x1xf32>
      %71 = vector.broadcast %70 : vector<8x1xf32> to vector<8x128xf32>
      %72 = arith.subf %68, %71 : vector<8x128xf32>
      %73 = math.exp %72 : vector<8x128xf32>
      %cst_52 = arith.constant dense<0.000000e+00> : vector<8xf32>
      %74 = vector.multi_reduction <add>, %73, %cst_52 [1] : vector<8x128xf32> to vector<8xf32>
      %75 = vector.shape_cast %74 : vector<8xf32> to vector<8x1xf32>
      %76 = tpu.reciprocal %75 {approx = true} : vector<8x1xf32> -> vector<8x1xf32>
      %77 = vector.broadcast %76 : vector<8x1xf32> to vector<8x128xf32>
      %78 = arith.mulf %73, %77 : vector<8x128xf32>
      %c0_53 = arith.constant 0 : index
      %c0_54 = arith.constant 0 : index
      %79 = vector.load %arg15[%c0_53, %c0_54] : memref<8x128xf32, #tpu.memory_space<vmem>>, vector<8x128xf32>
      tpu.vector_store %arg15[%c0_53, %c0_54], %78 {strides = array<i32>} : memref<8x128xf32, #tpu.memory_space<vmem>>, vector<8x128xf32>,
      %80 = arith.truncf %78 : vector<8x128xf32> to vector<8x128xbf16>
      %c0_55 = arith.constant 0 : index
      %c0_56 = arith.constant 0 : index
      %81 = vector.load %arg17[%c0_55, %c0_56] : memref<8x128xbf16, #tpu.memory_space<vmem>>, vector<8x128xbf16>
      tpu.vector_store %arg17[%c0_55, %c0_56], %80 {strides = array<i32>} : memref<8x128xbf16, #tpu.memory_space<vmem>>, vector<8x128xbf16>,
      %82 = arith.truncf %20 : vector<8x64xf32> to vector<8x64xbf16>
      %c0_57 = arith.constant 0 : index
      %c0_58 = arith.constant 0 : index
      %83 = vector.load %arg18[%c0_57, %c0_58] : memref<8x64xbf16, #tpu.memory_space<vmem>>, vector<8x64xbf16>
      tpu.vector_store %arg18[%c0_57, %c0_58], %82 {strides = array<i32>} : memref<8x64xbf16, #tpu.memory_space<vmem>>, vector<8x64xbf16>,
      %cst_59 = arith.constant 0.000000e+00 : f32
      %84 = vector.broadcast %cst_59 : f32 to vector<8x128xf32>
      %c0_60 = arith.constant 0 : index
      %c0_61 = arith.constant 0 : index
      %85 = vector.load %arg13[%c0_60, %c0_61] : memref<1x128xf32, #tpu.memory_space<vmem>>, vector<1x128xf32>
      %86 = vector.broadcast %85 : vector<1x128xf32> to vector<8x128xf32>
      %87 = arith.addf %84, %86 : vector<8x128xf32>
      %c0_62 = arith.constant 0 : index
      %c0_63 = arith.constant 0 : index
      %88 = vector.load %arg16[%c0_62, %c0_63] : memref<8x128xf32, #tpu.memory_space<vmem>>, vector<8x128xf32>
      tpu.vector_store %arg16[%c0_62, %c0_63], %87 {strides = array<i32>} : memref<8x128xf32, #tpu.memory_space<vmem>>, vector<8x128xf32>,
    } else {
    }
    %c0 = arith.constant 0 : index
    %c0_1 = arith.constant 0 : index
    %3 = vector.load %arg17[%c0, %c0_1] : memref<8x128xbf16, #tpu.memory_space<vmem>>, vector<8x128xbf16>
    %c0_2 = arith.constant 0 : index
    %c0_3 = arith.constant 0 : index
    %4 = vector.load %arg9[%c0_2, %c0_3] : memref<128x128xbf16, #tpu.memory_space<vmem>>, vector<128x128xbf16>
    %cst = arith.constant dense<0.000000e+00> : vector<8x128xf32>
    %5 = tpu.matmul %3, %4, %cst {dimension_numbers = #tpu.dot_dimension_numbers<[1], [0], [0], [1], [0, 0, 1, 1], [], []>} : vector<8x128xbf16>, vector<128x128xbf16>, vector<8x128xf32> -> vector<8x128xf32>
    %c0_4 = arith.constant 0 : index
    %c0_5 = arith.constant 0 : index
    %6 = vector.load %arg18[%c0_4, %c0_5] : memref<8x64xbf16, #tpu.memory_space<vmem>>, vector<8x64xbf16>
    %c0_6 = arith.constant 0 : index
    %c0_7 = arith.constant 0 : index
    %7 = vector.load %arg10[%c0_6, %c0_7] : memref<64x128xbf16, #tpu.memory_space<vmem>>, vector<64x128xbf16>
    %cst_8 = arith.constant dense<0.000000e+00> : vector<8x128xf32>
    %8 = tpu.matmul %6, %7, %cst_8 {dimension_numbers = #tpu.dot_dimension_numbers<[1], [0], [0], [1], [0, 0, 1, 1], [], []>} : vector<8x64xbf16>, vector<64x128xbf16>, vector<8x128xf32> -> vector<8x128xf32>
    %9 = arith.addf %5, %8 : vector<8x128xf32>
    %c0_9 = arith.constant 0 : index
    %c0_10 = arith.constant 0 : index
    %10 = vector.load %arg11[%c0_9, %c0_10] : memref<1x128xf32, #tpu.memory_space<vmem>>, vector<1x128xf32>
    %11 = vector.broadcast %10 : vector<1x128xf32> to vector<8x128xf32>
    %12 = arith.addf %9, %11 : vector<8x128xf32>
    %13 = math.tanh %12 : vector<8x128xf32>
    %c0_11 = arith.constant 0 : index
    %c0_12 = arith.constant 0 : index
    %14 = vector.load %arg16[%c0_11, %c0_12] : memref<8x128xf32, #tpu.memory_space<vmem>>, vector<8x128xf32>
    %15 = arith.truncf %13 : vector<8x128xf32> to vector<8x128xbf16>
    %c0_13 = arith.constant 0 : index
    %c0_14 = arith.constant 0 : index
    %16 = vector.load %arg12[%c0_13, %c0_14] : memref<128x128xbf16, #tpu.memory_space<vmem>>, vector<128x128xbf16>
    %cst_15 = arith.constant dense<0.000000e+00> : vector<8x128xf32>
    %17 = tpu.matmul %15, %16, %cst_15 {dimension_numbers = #tpu.dot_dimension_numbers<[1], [0], [0], [1], [0, 0, 1, 1], [], []>} : vector<8x128xbf16>, vector<128x128xbf16>, vector<8x128xf32> -> vector<8x128xf32>
    %18 = arith.addf %14, %17 : vector<8x128xf32>
    %c0_16 = arith.constant 0 : index
    %c0_17 = arith.constant 0 : index
    %19 = vector.load %arg16[%c0_16, %c0_17] : memref<8x128xf32, #tpu.memory_space<vmem>>, vector<8x128xf32>
    tpu.vector_store %arg16[%c0_16, %c0_17], %18 {strides = array<i32>} : memref<8x128xf32, #tpu.memory_space<vmem>>, vector<8x128xf32>,
    return
  }
  func.func @transform_0(%arg0: i32) -> (i32, i32) {
    %c0_i32 = arith.constant 0 : i32
    %c0_i32_0 = arith.constant 0 : i32
    %c0_i32_1 = arith.constant 0 : i32
    return %c0_i32, %c0_i32_0 : i32, i32
  }
  func.func @transform_1(%arg0: i32) -> (i32, i32) {
    %c0_i32 = arith.constant 0 : i32
    %c0_i32_0 = arith.constant 0 : i32
    %c0_i32_1 = arith.constant 0 : i32
    return %c0_i32, %c0_i32_0 : i32, i32
  }
  func.func @transform_2(%arg0: i32) -> (i32, i32) {
    %c0_i32 = arith.constant 0 : i32
    %c0_i32_0 = arith.constant 0 : i32
    %c0_i32_1 = arith.constant 0 : i32
    return %c0_i32, %c0_i32_0 : i32, i32
  }
  func.func @transform_3(%arg0: i32) -> (i32, i32) {
    %c0_i32 = arith.constant 0 : i32
    %c0_i32_0 = arith.constant 0 : i32
    %c0_i32_1 = arith.constant 0 : i32
    return %c0_i32, %c0_i32_0 : i32, i32
  }
  func.func @transform_4(%arg0: i32) -> (i32, i32) {
    %c0_i32 = arith.constant 0 : i32
    %c0_i32_0 = arith.constant 0 : i32
    %c0_i32_1 = arith.constant 0 : i32
    return %c0_i32, %c0_i32_0 : i32, i32
  }
  func.func @transform_5(%arg0: i32) -> (i32, i32) {
    %c0_i32 = arith.constant 0 : i32
    %c0_i32_0 = arith.constant 0 : i32
    %c0_i32_1 = arith.constant 0 : i32
    return %c0_i32, %c0_i32_0 : i32, i32
  }
  func.func @transform_6(%arg0: i32) -> (i32, i32) {
    %c0_i32 = arith.constant 0 : i32
    %c0_i32_0 = arith.constant 0 : i32
    %c0_i32_1 = arith.constant 0 : i32
    return %c0_i32, %c0_i32_0 : i32, i32
  }
  func.func @transform_7(%arg0: i32) -> (i32, i32) {
    %c0_i32 = arith.constant 0 : i32
    %c0_i32_0 = arith.constant 0 : i32
    %c0_i32_1 = arith.constant 0 : i32
    return %c0_i32, %c0_i32_0 : i32, i32
  }
  func.func @transform_8(%arg0: i32) -> (i32, i32) {
    %c0_i32 = arith.constant 0 : i32
    %c0_i32_0 = arith.constant 0 : i32
    return %c0_i32, %arg0 : i32, i32
  }
  func.func @transform_9(%arg0: i32) -> (i32, i32) {
    %c0_i32 = arith.constant 0 : i32
    %c0_i32_0 = arith.constant 0 : i32
    return %c0_i32, %arg0 : i32, i32
  }
  func.func @transform_10(%arg0: i32) -> (i32, i32) {
    %c0_i32 = arith.constant 0 : i32
    %c0_i32_0 = arith.constant 0 : i32
    return %c0_i32, %arg0 : i32, i32
  }
  func.func @transform_11(%arg0: i32) -> (i32, i32) {
    %c0_i32 = arith.constant 0 : i32
    %c0_i32_0 = arith.constant 0 : i32
    return %arg0, %c0_i32 : i32, i32
  }
  func.func @transform_12(%arg0: i32) -> (i32, i32) {
    %c0_i32 = arith.constant 0 : i32
    %c0_i32_0 = arith.constant 0 : i32
    %c0_i32_1 = arith.constant 0 : i32
    return %c0_i32, %c0_i32_0 : i32, i32
  }
  func.func @transform_13(%arg0: i32) -> (i32, i32, i32) {
    %c0_i32 = arith.constant 0 : i32
    %c0_i32_0 = arith.constant 0 : i32
    %c0_i32_1 = arith.constant 0 : i32
    %c0_i32_2 = arith.constant 0 : i32
    return %c0_i32, %c0_i32_0, %c0_i32_1 : i32, i32, i32
  }
  func.func @transform_14(%arg0: i32) -> (i32, i32) {
    %c0_i32 = arith.constant 0 : i32
    %c0_i32_0 = arith.constant 0 : i32
    %c0_i32_1 = arith.constant 0 : i32
    return %c0_i32, %c0_i32_0 : i32, i32
  }
  func.func @transform_15(%arg0: i32) -> (i32, i32) {
    %c0_i32 = arith.constant 0 : i32
    %c0_i32_0 = arith.constant 0 : i32
    %c0_i32_1 = arith.constant 0 : i32
    return %c0_i32, %c0_i32_0 : i32, i32
  }
}

</mosaic_0001>

<llo_original>
// kernel: tpu_custom_call.1
$region0: #{tpu_custom_call.1}
  #allocation0 [shape = 'u32[]', space=smem, size = 0x4, offset = 0x4, fixed_abs, tag = 'smem constant byte address 0x4 - core index']
  #allocation1 [shape = 'u32[144,128]{1,0:T(1,128)}', space=vmem, size = 0x12000, scoped, tag = 'internal scratch']
  #allocation2 [shape = 'bf16[8,128]{1,0:T(8,128)(2,1)}', space=vmem, size = 0x800, scoped, tag = 'scratch operand']
  #allocation3 [shape = 'bf16[8,64]{1,0:T(8,128)(2,1)}', space=vmem, size = 0x800, scoped, tag = 'scratch operand']
  %s0 = inlined_call_operand.hbm [shape: f32[8,64], index: 0, kind: input, shape index: {}]
  %s1 = inlined_call_operand.hbm [shape: f32[8,16], index: 1, kind: input, shape index: {}]
  %s2 = inlined_call_operand.hbm [shape: f32[64,128], index: 2, kind: input, shape index: {}]
  %s3 = inlined_call_operand.hbm [shape: f32[128,128], index: 3, kind: input, shape index: {}]
  %s4 = inlined_call_operand.hbm [shape: f32[128,32], index: 4, kind: input, shape index: {}]
  %s5 = inlined_call_operand.hbm [shape: f32[2,128], index: 5, kind: input, shape index: {}]
  %s6 = inlined_call_operand.hbm [shape: f32[1,32], index: 6, kind: input, shape index: {}]
  %s7 = inlined_call_operand.hbm [shape: bf16[16,128], index: 7, kind: input, shape index: {}]
  %s8 = inlined_call_operand.hbm [shape: bf16[128,512], index: 8, kind: input, shape index: {}]
  %s9 = inlined_call_operand.hbm [shape: bf16[64,512], index: 9, kind: input, shape index: {}]
  %s10 = inlined_call_operand.hbm [shape: f32[1,512], index: 10, kind: input, shape index: {}]
  %s11 = inlined_call_operand.hbm [shape: bf16[512,128], index: 11, kind: input, shape index: {}]
  %s12 = inlined_call_operand.hbm [shape: f32[1,128], index: 12, kind: input, shape index: {}]
  %s13 = inlined_call_operand.hbm [shape: f32[3,8,16], index: 13, kind: output, shape index: {0}]
  %s14 = inlined_call_operand.hbm [shape: f32[8,128], index: 14, kind: output, shape index: {1}]
  %s15 = inlined_call_operand.hbm [shape: f32[8,128], index: 15, kind: output, shape index: {2}]
  %16 = xla_tuple %s13, %s14, %s15
  %s17 = sld [smem:[#allocation0]]
  $region157: #{tpu_custom_call.1} parent=0
    _
  %s19 = ssub.s32 1, %s17
  %s20 = scalar_select 0, %s19, %s17
  $region1: #{tpu_custom_call.1} parent=0
    #allocation4 [shape = 'u8[4096]{0}', space=vmem, size = 0x1000, scoped, tag = 'input window, operand 0, single buffered']
    #allocation5 [shape = 's32[2]{0}', space=sflag, size = 0x8, scoped, tag = 'scoped memory for tpu_custom_call.1']
    #allocation6 [shape = 's32[2]{0}', space=sflag, size = 0x8, scoped, tag = 'scoped memory for tpu_custom_call.1']
    #allocation7 [shape = 'u8[4096]{0}', space=vmem, size = 0x1000, scoped, tag = 'input window, operand 1, single buffered']
    #allocation8 [shape = 's32[1]{0}', space=sflag, size = 0x4, scoped, tag = 'scoped memory for tpu_custom_call.1']
    #allocation9 [shape = 'u8[32768]{0}', space=vmem, size = 0x8000, scoped, tag = 'input window, operand 2, single buffered']
    #allocation10 [shape = 'u8[65536]{0}', space=vmem, size = 0x10000, scoped, tag = 'input window, operand 3, single buffered']
    #allocation11 [shape = 's32[1]{0}', space=sflag, size = 0x4, scoped, tag = 'scoped memory for tpu_custom_call.1']
    #allocation12 [shape = 'u8[65536]{0}', space=vmem, size = 0x10000, scoped, tag = 'input window, operand 4, single buffered']
    #allocation13 [shape = 'u8[1024]{0}', space=vmem, size = 0x400, scoped, tag = 'input window, operand 5, single buffered']
    #allocation14 [shape = 's32[1]{0}', space=sflag, size = 0x4, scoped, tag = 'scoped memory for tpu_custom_call.1']
    #allocation15 [shape = 'u8[512]{0}', space=vmem, size = 0x400, scoped, tag = 'input window, operand 6, single buffered']
    #allocation16 [shape = 'u8[4096]{0}', space=vmem, size = 0x1000, scoped, tag = 'input window, operand 7, single buffered']
    #allocation17 [shape = 's32[1]{0}', space=sflag, size = 0x4, scoped, tag = 'scoped memory for tpu_custom_call.1']
    #allocation18 [shape = 'u8[65536]{0}', space=vmem, size = 0x10000, scoped, tag = 'input window, operand 8']
    #allocation19 [shape = 'u8[32768]{0}', space=vmem, size = 0x8000, scoped, tag = 'input window, operand 9']
    #allocation20 [shape = 'u8[1024]{0}', space=vmem, size = 0x400, scoped, tag = 'input window, operand 10']
    #allocation21 [shape = 'u8[65536]{0}', space=vmem, size = 0x10000, scoped, tag = 'input window, operand 11']
    #allocation22 [shape = 'u8[512]{0}', space=vmem, size = 0x400, scoped, tag = 'input window, operand 12, single buffered']
    #allocation23 [shape = 'u8[12288]{0}', space=vmem, size = 0x3000, scoped, tag = 'output window, operand 0, single buffered']
    #allocation24 [shape = 'u8[4096]{0}', space=vmem, size = 0x1000, scoped, tag = 'output window, operand 1, single buffered']
    #allocation25 [shape = 's32[1]{0}', space=sflag, size = 0x4, scoped, tag = 'scoped memory for tpu_custom_call.1']
    #allocation26 [shape = 'u8[4096]{0}', space=vmem, size = 0x1000, scoped, tag = 'output window, operand 2, single buffered']
    %21 = vsyncpa [#allocation5], 0
    %22 = vsyncpa [#allocation8], 0
    %23 = vsyncpa [#allocation11], 0
    %24 = vsyncpa [#allocation14], 0
    %25 = vsyncpa [#allocation17], 0
    %26 = vsyncpa [#allocation6], 0
    %27 = vsyncpa [#allocation25], 0
    loop: start=0, step=1, limit=6
    $region2: #{tpu_custom_call.1} parent=1 // loop_pre_header
      _
    $region3: #{tpu_custom_call.1} parent=1 // loop_header
      %s29 = sphi 0, %s33
      %p30 = scmp.ge.s32.totalorder %s29, 6
      %s37 = sphi 0, %s37
      %s39 = sphi 0, %s37
      %s40 = sphi 0, %s39
      %s54 = sphi 0, %s40
      %s58 = sphi 0, %s58
      %s60 = sphi 0, %s58
      %s61 = sphi 0, %s60
      %s75 = sphi 0, %s61
      %s79 = sphi 0, %s79
      %s81 = sphi 0, %s79
      %s82 = sphi 0, %s81
      %s96 = sphi 0, %s82
      %s100 = sphi 0, %s100
      %s102 = sphi 0, %s100
      %s103 = sphi 0, %s102
      %s117 = sphi 0, %s103
      %s121 = sphi 0, %s121
      %s123 = sphi 0, %s121
      %s124 = sphi 0, %s123
      %s138 = sphi 0, %s124
      %s142 = sphi 0, %s142
      %s144 = sphi 0, %s142
      %s145 = sphi 0, %s144
      %s159 = sphi 0, %s145
      %s163 = sphi 0, %s163
      %s165 = sphi 0, %s163
      %s166 = sphi 0, %s165
      %s180 = sphi 0, %s166
      %s184 = sphi 0, %s184
      %s186 = sphi 0, %s184
      %s187 = sphi 0, %s186
      %s201 = sphi 0, %s187
      %s207 = sphi 0, %s209
      %s210 = sphi 0, %s207
      %s211 = sphi 0, %s210
      %s227 = sphi 0, %s211
      %s233 = sphi 0, %s235
      %s236 = sphi 0, %s233
      %s237 = sphi 0, %s236
      %s253 = sphi 0, %s237
      %s259 = sphi 0, %s261
      %s262 = sphi 0, %s259
      %s263 = sphi 0, %s262
      %s279 = sphi 0, %s263
      %s285 = sphi 0, %s287
      %s288 = sphi 0, %s285
      %s289 = sphi 0, %s288
      %s305 = sphi 0, %s289
      %s309 = sphi 0, %s309
      %s311 = sphi 0, %s309
      %s312 = sphi 0, %s311
      %s326 = sphi 0, %s312
      %s330 = sphi 0, %s330
      %s332 = sphi 0, %s330
      %s333 = sphi 0, %s332
      %s347 = sphi 0, %s333
      %s351 = sphi 0, %s351
      %s353 = sphi 0, %s351
      %s354 = sphi 0, %s353
      %s368 = sphi 0, %s354
      %s372 = sphi 0, %s372
      %s374 = sphi 0, %s372
      %s375 = sphi 0, %s374
      %s389 = sphi 0, %s375
    $region4: #{tpu_custom_call.1} parent=1 // loop_header_branch
      %32 = sbr.rel (%p30) target = $region8
    $region5: #{tpu_custom_call.1} parent=1 // loop_body
      %s34 = ssub.s32 %s29, 1
      %s35 = ssub.s32 %s29, 2
      %s36 = sadd.s32 %s29, 1
      %s38 = sadd.s32 %s37, 1
      %p41 = scmp.eq.s32.totalorder %s29, 3
      %p42 = scmp.ne.s32.totalorder %s37, %s39
      %p43 = scmp.eq.s32.totalorder %s29, 0
      %p44 = por %p42, %p43
      %p45 = scmp.ne.s32.totalorder %s37, %s39
      %p46 = scmp.eq.s32.totalorder %s34, 3
      %p47 = por %p45, %p46
      %p48 = scmp.ne.s32.totalorder %s39, %s40
      %p49 = scmp.eq.s32.totalorder %s34, 0
      %p50 = por %p48, %p49
      %p51 = scmp.ne.s32.totalorder %s39, %s40
      %p52 = scmp.eq.s32.totalorder %s35, 3
      %p53 = por %p51, %p52
      %p55 = scmp.ne.s32.totalorder %s40, %s54
      %p56 = scmp.eq.s32.totalorder %s35, 0
      %p57 = por %p55, %p56
      %s59 = sadd.s32 %s58, 1
      %p62 = scmp.eq.s32.totalorder %s29, 3
      %p63 = scmp.ne.s32.totalorder %s58, %s60
      %p64 = scmp.eq.s32.totalorder %s29, 0
      %p65 = por %p63, %p64
      %p66 = scmp.ne.s32.totalorder %s58, %s60
      %p67 = scmp.eq.s32.totalorder %s34, 3
      %p68 = por %p66, %p67
      %p69 = scmp.ne.s32.totalorder %s60, %s61
      %p70 = scmp.eq.s32.totalorder %s34, 0
      %p71 = por %p69, %p70
      %p72 = scmp.ne.s32.totalorder %s60, %s61
      %p73 = scmp.eq.s32.totalorder %s35, 3
      %p74 = por %p72, %p73
      %p76 = scmp.ne.s32.totalorder %s61, %s75
      %p77 = scmp.eq.s32.totalorder %s35, 0
      %p78 = por %p76, %p77
      %s80 = sadd.s32 %s79, 1
      %p83 = scmp.eq.s32.totalorder %s29, 3
      %p84 = scmp.ne.s32.totalorder %s79, %s81
      %p85 = scmp.eq.s32.totalorder %s29, 0
      %p86 = por %p84, %p85
      %p87 = scmp.ne.s32.totalorder %s79, %s81
      %p88 = scmp.eq.s32.totalorder %s34, 3
      %p89 = por %p87, %p88
      %p90 = scmp.ne.s32.totalorder %s81, %s82
      %p91 = scmp.eq.s32.totalorder %s34, 0
      %p92 = por %p90, %p91
      %p93 = scmp.ne.s32.totalorder %s81, %s82
      %p94 = scmp.eq.s32.totalorder %s35, 3
      %p95 = por %p93, %p94
      %p97 = scmp.ne.s32.totalorder %s82, %s96
      %p98 = scmp.eq.s32.totalorder %s35, 0
      %p99 = por %p97, %p98
      %s101 = sadd.s32 %s100, 1
      %p104 = scmp.eq.s32.totalorder %s29, 3
      %p105 = scmp.ne.s32.totalorder %s100, %s102
      %p106 = scmp.eq.s32.totalorder %s29, 0
      %p107 = por %p105, %p106
      %p108 = scmp.ne.s32.totalorder %s100, %s102
      %p109 = scmp.eq.s32.totalorder %s34, 3
      %p110 = por %p108, %p109
      %p111 = scmp.ne.s32.totalorder %s102, %s103
      %p112 = scmp.eq.s32.totalorder %s34, 0
      %p113 = por %p111, %p112
      %p114 = scmp.ne.s32.totalorder %s102, %s103
      %p115 = scmp.eq.s32.totalorder %s35, 3
      %p116 = por %p114, %p115
      %p118 = scmp.ne.s32.totalorder %s103, %s117
      %p119 = scmp.eq.s32.totalorder %s35, 0
      %p120 = por %p118, %p119
      %s122 = sadd.s32 %s121, 1
      %p125 = scmp.eq.s32.totalorder %s29, 3
      %p126 = scmp.ne.s32.totalorder %s121, %s123
      %p127 = scmp.eq.s32.totalorder %s29, 0
      %p128 = por %p126, %p127
      %p129 = scmp.ne.s32.totalorder %s121, %s123
      %p130 = scmp.eq.s32.totalorder %s34, 3
      %p131 = por %p129, %p130
      %p132 = scmp.ne.s32.totalorder %s123, %s124
      %p133 = scmp.eq.s32.totalorder %s34, 0
      %p134 = por %p132, %p133
      %p135 = scmp.ne.s32.totalorder %s123, %s124
      %p136 = scmp.eq.s32.totalorder %s35, 3
      %p137 = por %p135, %p136
      %p139 = scmp.ne.s32.totalorder %s124, %s138
      %p140 = scmp.eq.s32.totalorder %s35, 0
      %p141 = por %p139, %p140
      %s143 = sadd.s32 %s142, 1
      %p146 = scmp.eq.s32.totalorder %s29, 3
      %p147 = scmp.ne.s32.totalorder %s142, %s144
      %p148 = scmp.eq.s32.totalorder %s29, 0
      %p149 = por %p147, %p148
      %p150 = scmp.ne.s32.totalorder %s142, %s144
      %p151 = scmp.eq.s32.totalorder %s34, 3
      %p152 = por %p150, %p151
      %p153 = scmp.ne.s32.totalorder %s144, %s145
      %p154 = scmp.eq.s32.totalorder %s34, 0
      %p155 = por %p153, %p154
      %p156 = scmp.ne.s32.totalorder %s144, %s145
      %p157 = scmp.eq.s32.totalorder %s35, 3
      %p158 = por %p156, %p157
      %p160 = scmp.ne.s32.totalorder %s145, %s159
      %p161 = scmp.eq.s32.totalorder %s35, 0
      %p162 = por %p160, %p161
      %s164 = sadd.s32 %s163, 1
      %p167 = scmp.eq.s32.totalorder %s29, 3
      %p168 = scmp.ne.s32.totalorder %s163, %s165
      %p169 = scmp.eq.s32.totalorder %s29, 0
      %p170 = por %p168, %p169
      %p171 = scmp.ne.s32.totalorder %s163, %s165
      %p172 = scmp.eq.s32.totalorder %s34, 3
      %p173 = por %p171, %p172
      %p174 = scmp.ne.s32.totalorder %s165, %s166
      %p175 = scmp.eq.s32.totalorder %s34, 0
      %p176 = por %p174, %p175
      %p177 = scmp.ne.s32.totalorder %s165, %s166
      %p178 = scmp.eq.s32.totalorder %s35, 3
      %p179 = por %p177, %p178
      %p181 = scmp.ne.s32.totalorder %s166, %s180
      %p182 = scmp.eq.s32.totalorder %s35, 0
      %p183 = por %p181, %p182
      %s185 = sadd.s32 %s184, 1
      %p188 = scmp.eq.s32.totalorder %s29, 3
      %p189 = scmp.ne.s32.totalorder %s184, %s186
      %p190 = scmp.eq.s32.totalorder %s29, 0
      %p191 = por %p189, %p190
      %p192 = scmp.ne.s32.totalorder %s184, %s186
      %p193 = scmp.eq.s32.totalorder %s34, 3
      %p194 = por %p192, %p193
      %p195 = scmp.ne.s32.totalorder %s186, %s187
      %p196 = scmp.eq.s32.totalorder %s34, 0
      %p197 = por %p195, %p196
      %p198 = scmp.ne.s32.totalorder %s186, %s187
      %p199 = scmp.eq.s32.totalorder %s35, 3
      %p200 = por %p198, %p199
      %p202 = scmp.ne.s32.totalorder %s187, %s201
      %p203 = scmp.eq.s32.totalorder %s35, 0
      %p204 = por %p202, %p203
      %s205 = ssub.s32 %s29, %s36
      %p206 = scmp.eq.s32.totalorder %s205, 0
      %s208 = sadd.s32 %s207, 1
      %s209 = scalar_select %p206, %s207, %s208
      %p212 = pneg %p206
      %p213 = scmp.eq.s32.totalorder %s29, 3
      %p214 = por %p212, %p213
      %p215 = scmp.ne.s32.totalorder %s207, %s210
      %p216 = scmp.eq.s32.totalorder %s29, 0
      %p217 = por %p215, %p216
      %p218 = scmp.ne.s32.totalorder %s207, %s210
      %p219 = scmp.eq.s32.totalorder %s34, 3
      %p220 = por %p218, %p219
      %p221 = scmp.ne.s32.totalorder %s210, %s211
      %p222 = scmp.eq.s32.totalorder %s34, 0
      %p223 = por %p221, %p222
      %p224 = scmp.ne.s32.totalorder %s210, %s211
      %p225 = scmp.eq.s32.totalorder %s35, 3
      %p226 = por %p224, %p225
      %p228 = scmp.ne.s32.totalorder %s211, %s227
      %p229 = scmp.eq.s32.totalorder %s35, 0
      %p230 = por %p228, %p229
      %s231 = ssub.s32 %s29, %s36
      %p232 = scmp.eq.s32.totalorder %s231, 0
      %s234 = sadd.s32 %s233, 1
      %s235 = scalar_select %p232, %s233, %s234
      %p238 = pneg %p232
      %p239 = scmp.eq.s32.totalorder %s29, 3
      %p240 = por %p238, %p239
      %p241 = scmp.ne.s32.totalorder %s233, %s236
      %p242 = scmp.eq.s32.totalorder %s29, 0
      %p243 = por %p241, %p242
      %p244 = scmp.ne.s32.totalorder %s233, %s236
      %p245 = scmp.eq.s32.totalorder %s34, 3
      %p246 = por %p244, %p245
      %p247 = scmp.ne.s32.totalorder %s236, %s237
      %p248 = scmp.eq.s32.totalorder %s34, 0
      %p249 = por %p247, %p248
      %p250 = scmp.ne.s32.totalorder %s236, %s237
      %p251 = scmp.eq.s32.totalorder %s35, 3
      %p252 = por %p250, %p251
      %p254 = scmp.ne.s32.totalorder %s237, %s253
      %p255 = scmp.eq.s32.totalorder %s35, 0
      %p256 = por %p254, %p255
      %s257 = ssub.s32 %s29, %s36
      %p258 = scmp.eq.s32.totalorder %s257, 0
      %s260 = sadd.s32 %s259, 1
      %s261 = scalar_select %p258, %s259, %s260
      %p264 = pneg %p258
      %p265 = scmp.eq.s32.totalorder %s29, 3
      %p266 = por %p264, %p265
      %p267 = scmp.ne.s32.totalorder %s259, %s262
      %p268 = scmp.eq.s32.totalorder %s29, 0
      %p269 = por %p267, %p268
      %p270 = scmp.ne.s32.totalorder %s259, %s262
      %p271 = scmp.eq.s32.totalorder %s34, 3
      %p272 = por %p270, %p271
      %p273 = scmp.ne.s32.totalorder %s262, %s263
      %p274 = scmp.eq.s32.totalorder %s34, 0
      %p275 = por %p273, %p274
      %p276 = scmp.ne.s32.totalorder %s262, %s263
      %p277 = scmp.eq.s32.totalorder %s35, 3
      %p278 = por %p276, %p277
      %p280 = scmp.ne.s32.totalorder %s263, %s279
      %p281 = scmp.eq.s32.totalorder %s35, 0
      %p282 = por %p280, %p281
      %s283 = ssub.s32 %s29, %s36
      %p284 = scmp.eq.s32.totalorder %s283, 0
      %s286 = sadd.s32 %s285, 1
      %s287 = scalar_select %p284, %s285, %s286
      %p290 = pneg %p284
      %p291 = scmp.eq.s32.totalorder %s29, 3
      %p292 = por %p290, %p291
      %p293 = scmp.ne.s32.totalorder %s285, %s288
      %p294 = scmp.eq.s32.totalorder %s29, 0
      %p295 = por %p293, %p294
      %p296 = scmp.ne.s32.totalorder %s285, %s288
      %p297 = scmp.eq.s32.totalorder %s34, 3
      %p298 = por %p296, %p297
      %p299 = scmp.ne.s32.totalorder %s288, %s289
      %p300 = scmp.eq.s32.totalorder %s34, 0
      %p301 = por %p299, %p300
      %p302 = scmp.ne.s32.totalorder %s288, %s289
      %p303 = scmp.eq.s32.totalorder %s35, 3
      %p304 = por %p302, %p303
      %p306 = scmp.ne.s32.totalorder %s289, %s305
      %p307 = scmp.eq.s32.totalorder %s35, 0
      %p308 = por %p306, %p307
      %s310 = sadd.s32 %s309, 1
      %p313 = scmp.eq.s32.totalorder %s29, 3
      %p314 = scmp.ne.s32.totalorder %s309, %s311
      %p315 = scmp.eq.s32.totalorder %s29, 0
      %p316 = por %p314, %p315
      %p317 = scmp.ne.s32.totalorder %s309, %s311
      %p318 = scmp.eq.s32.totalorder %s34, 3
      %p319 = por %p317, %p318
      %p320 = scmp.ne.s32.totalorder %s311, %s312
      %p321 = scmp.eq.s32.totalorder %s34, 0
      %p322 = por %p320, %p321
      %p323 = scmp.ne.s32.totalorder %s311, %s312
      %p324 = scmp.eq.s32.totalorder %s35, 3
      %p325 = por %p323, %p324
      %p327 = scmp.ne.s32.totalorder %s312, %s326
      %p328 = scmp.eq.s32.totalorder %s35, 0
      %p329 = por %p327, %p328
      %s331 = sadd.s32 %s330, 1
      %p334 = scmp.eq.s32.totalorder %s29, 3
      %p335 = scmp.ne.s32.totalorder %s330, %s332
      %p336 = scmp.eq.s32.totalorder %s29, 0
      %p337 = por %p335, %p336
      %p338 = scmp.ne.s32.totalorder %s330, %s332
      %p339 = scmp.eq.s32.totalorder %s34, 3
      %p340 = por %p338, %p339
      %p341 = scmp.ne.s32.totalorder %s332, %s333
      %p342 = scmp.eq.s32.totalorder %s34, 0
      %p343 = por %p341, %p342
      %p344 = scmp.ne.s32.totalorder %s332, %s333
      %p345 = scmp.eq.s32.totalorder %s35, 3
      %p346 = por %p344, %p345
      %p348 = scmp.ne.s32.totalorder %s333, %s347
      %p349 = scmp.eq.s32.totalorder %s35, 0
      %p350 = por %p348, %p349
      %s352 = sadd.s32 %s351, 1
      %p355 = scmp.eq.s32.totalorder %s29, 3
      %p356 = scmp.ne.s32.totalorder %s351, %s353
      %p357 = scmp.eq.s32.totalorder %s29, 0
      %p358 = por %p356, %p357
      %p359 = scmp.ne.s32.totalorder %s351, %s353
      %p360 = scmp.eq.s32.totalorder %s34, 3
      %p361 = por %p359, %p360
      %p362 = scmp.ne.s32.totalorder %s353, %s354
      %p363 = scmp.eq.s32.totalorder %s34, 0
      %p364 = por %p362, %p363
      %p365 = scmp.ne.s32.totalorder %s353, %s354
      %p366 = scmp.eq.s32.totalorder %s35, 3
      %p367 = por %p365, %p366
      %p369 = scmp.ne.s32.totalorder %s354, %s368
      %p370 = scmp.eq.s32.totalorder %s35, 0
      %p371 = por %p369, %p370
      %s373 = sadd.s32 %s372, 1
      %p376 = scmp.eq.s32.totalorder %s29, 3
      %p377 = scmp.ne.s32.totalorder %s372, %s374
      %p378 = scmp.eq.s32.totalorder %s29, 0
      %p379 = por %p377, %p378
      %p380 = scmp.ne.s32.totalorder %s372, %s374
      %p381 = scmp.eq.s32.totalorder %s34, 3
      %p382 = por %p380, %p381
      %p383 = scmp.ne.s32.totalorder %s374, %s375
      %p384 = scmp.eq.s32.totalorder %s34, 0
      %p385 = por %p383, %p384
      %p386 = scmp.ne.s32.totalorder %s374, %s375
      %p387 = scmp.eq.s32.totalorder %s35, 3
      %p388 = por %p386, %p387
      %p390 = scmp.ne.s32.totalorder %s375, %s389
      %p391 = scmp.eq.s32.totalorder %s35, 0
      %p392 = por %p390, %p391
      %p393 = scmp.le.s32.totalorder 1, %s29
      %p394 = scmp.lt.s32.totalorder %s29, 5
      %p395 = pnand %p393, %p394
      %p396 = pneg %p395
      // Predicated region
      $region9: #{tpu_custom_call.1} parent=5 // pred_check
        _
      $region10: #{tpu_custom_call.1} parent=5 // pred_check_branch
        %398 = sbr.rel (%p395) target = $region12
      $region11: #{tpu_custom_call.1} parent=5 // pred_region
        %s399 = ssub.s32 %s29, 1
        // Predicated region
        $region13: #{tpu_custom_call.1} parent=11 // pred_check
          %p400 = pneg %p50
        $region14: #{tpu_custom_call.1} parent=11 // pred_check_branch
          %402 = sbr.rel (%p400) target = $region16
        $region15: #{tpu_custom_call.1} parent=11 // pred_region
          %s404 = ssub.s32 128, 128
          %405 = vsyncadd [#allocation5], %s404
          %s407 = sshll.u32 [#allocation4], 4
          %s408 = int_to_ptr.vmem [resolvable:$true] %s407
          %410 = dma.hbm_to_vmem [thread:$0]  %s0, 128, %s408, [#allocation5]
        $region16: #{tpu_custom_call.1} parent=11 // pred_fallthru
          _
        // Predicated region
        $region17: #{tpu_custom_call.1} parent=11 // pred_check
          %p411 = pneg %p71
        $region18: #{tpu_custom_call.1} parent=11 // pred_check_branch
          %413 = sbr.rel (%p411) target = $region20
        $region19: #{tpu_custom_call.1} parent=11 // pred_region
          %s415 = ssub.s32 128, 128
          %416 = vsyncadd [#allocation8], %s415
          %s418 = sshll.u32 [#allocation7], 4
          %s419 = int_to_ptr.vmem [resolvable:$true] %s418
          %421 = dma.hbm_to_vmem [thread:$0]  %s1, 128, %s419, [#allocation8]
        $region20: #{tpu_custom_call.1} parent=11 // pred_fallthru
          _
        // Predicated region
        $region21: #{tpu_custom_call.1} parent=11 // pred_check
          %p422 = pneg %p92
        $region22: #{tpu_custom_call.1} parent=11 // pred_check_branch
          %424 = sbr.rel (%p422) target = $region24
        $region23: #{tpu_custom_call.1} parent=11 // pred_region
          %s426 = ssub.s32 1024, 1024
          %427 = vsyncadd [#allocation8], %s426
          %s428 = sshll.u32 [#allocation9], 4
          %s429 = int_to_ptr.vmem [resolvable:$true] %s428
          %434 = dma.hbm_to_vmem [thread:$0]  %s2, 1024, %s429, [#allocation8], 128, 128, 8
        $region24: #{tpu_custom_call.1} parent=11 // pred_fallthru
          _
        // Predicated region
        $region25: #{tpu_custom_call.1} parent=11 // pred_check
          %p435 = pneg %p113
        $region26: #{tpu_custom_call.1} parent=11 // pred_check_branch
          %437 = sbr.rel (%p435) target = $region28
        $region27: #{tpu_custom_call.1} parent=11 // pred_region
          %s439 = ssub.s32 2048, 2048
          %440 = vsyncadd [#allocation11], %s439
          %s441 = sshll.u32 [#allocation10], 4
          %s442 = int_to_ptr.vmem [resolvable:$true] %s441
          %447 = dma.hbm_to_vmem [thread:$0]  %s3, 2048, %s442, [#allocation11], 128, 128, 8
        $region28: #{tpu_custom_call.1} parent=11 // pred_fallthru
          _
        // Predicated region
        $region29: #{tpu_custom_call.1} parent=11 // pred_check
          %p448 = pneg %p134
        $region30: #{tpu_custom_call.1} parent=11 // pred_check_branch
          %450 = sbr.rel (%p448) target = $region32
        $region31: #{tpu_custom_call.1} parent=11 // pred_region
          %s452 = ssub.s32 2048, 2048
          %453 = vsyncadd [#allocation11], %s452
          %s454 = sshll.u32 [#allocation12], 4
          %s455 = int_to_ptr.vmem [resolvable:$true] %s454
          %460 = dma.hbm_to_vmem [thread:$0]  %s4, 2048, %s455, [#allocation11], 128, 128, 8
        $region32: #{tpu_custom_call.1} parent=11 // pred_fallthru
          _
        // Predicated region
        $region33: #{tpu_custom_call.1} parent=11 // pred_check
          %p461 = pneg %p155
        $region34: #{tpu_custom_call.1} parent=11 // pred_check_branch
          %463 = sbr.rel (%p461) target = $region36
        $region35: #{tpu_custom_call.1} parent=11 // pred_region
          %s465 = ssub.s32 32, 32
          %466 = vsyncadd [#allocation14], %s465
          %s468 = sshll.u32 [#allocation13], 4
          %s469 = int_to_ptr.vmem [resolvable:$true] %s468
          %471 = dma.hbm_to_vmem [thread:$0]  %s5, 32, %s469, [#allocation14]
        $region36: #{tpu_custom_call.1} parent=11 // pred_fallthru
          _
        // Predicated region
        $region37: #{tpu_custom_call.1} parent=11 // pred_check
          %p472 = pneg %p176
        $region38: #{tpu_custom_call.1} parent=11 // pred_check_branch
          %474 = sbr.rel (%p472) target = $region40
        $region39: #{tpu_custom_call.1} parent=11 // pred_region
          %s476 = ssub.s32 16, 16
          %477 = vsyncadd [#allocation14], %s476
          %s479 = sshll.u32 [#allocation15], 4
          %s480 = int_to_ptr.vmem [resolvable:$true] %s479
          %482 = dma.hbm_to_vmem [thread:$0]  %s6, 16, %s480, [#allocation14]
        $region40: #{tpu_custom_call.1} parent=11 // pred_fallthru
          _
        // Predicated region
        $region41: #{tpu_custom_call.1} parent=11 // pred_check
          %p483 = pneg %p197
        $region42: #{tpu_custom_call.1} parent=11 // pred_check_branch
          %485 = sbr.rel (%p483) target = $region44
        $region43: #{tpu_custom_call.1} parent=11 // pred_region
          %s487 = ssub.s32 128, 128
          %488 = vsyncadd [#allocation17], %s487
          %s489 = sshll.u32 [#allocation16], 4
          %s490 = int_to_ptr.vmem [resolvable:$true] %s489
          %495 = dma.hbm_to_vmem [thread:$0]  %s7, 128, %s490, [#allocation17], 64, 64, 4
        $region44: #{tpu_custom_call.1} parent=11 // pred_fallthru
          _
        // Predicated region
        $region45: #{tpu_custom_call.1} parent=11 // pred_check
          %p496 = pneg %p322
        $region46: #{tpu_custom_call.1} parent=11 // pred_check_branch
          %498 = sbr.rel (%p496) target = $region48
        $region47: #{tpu_custom_call.1} parent=11 // pred_region
          %s500 = ssub.s32 16, 16
          %501 = vsyncadd [#allocation8], %s500
          %s503 = sshll.u32 [#allocation22], 4
          %s504 = int_to_ptr.vmem [resolvable:$true] %s503
          %506 = dma.hbm_to_vmem [thread:$0]  %s12, 16, %s504, [#allocation8]
        $region48: #{tpu_custom_call.1} parent=11 // pred_fallthru
          _
      $region12: #{tpu_custom_call.1} parent=5 // pred_fallthru
        _
      %p507 = scmp.lt.s32.totalorder %s29, 4
      // Predicated region
      $region49: #{tpu_custom_call.1} parent=5 // pred_check
        %p508 = pneg %p507
      $region50: #{tpu_custom_call.1} parent=5 // pred_check_branch
        %510 = sbr.rel (%p508) target = $region52
      $region51: #{tpu_custom_call.1} parent=5 // pred_region
        // Predicated region
        $region53: #{tpu_custom_call.1} parent=51 // pred_check
          %p511 = pneg %p217
        $region54: #{tpu_custom_call.1} parent=51 // pred_check_branch
          %513 = sbr.rel (%p511) target = $region56
        $region55: #{tpu_custom_call.1} parent=51 // pred_region
          %s514 = sand.u32 %s29, 1
          %s515 = scalar_lea.sflag [#allocation5], %s514
          %s516 = sand.u32 %s207, 1
          %s517 = smul.addr %s516, 64
          %s518 = scalar_lea.vmem [#allocation18], %s517
          %s520 = ssub.s32 1024, 1024
          %521 = vsyncadd %s515, %s520
          %s522 = smul.addr %s29, 64
          %s523 = scalar_lea.hbm %s8, %s522
          %s524 = sshll.u32 %s518, 4
          %s525 = int_to_ptr.vmem [resolvable:$true] %s524
          %530 = dma.hbm_to_vmem [thread:$0]  %s523, 1024, %s525, %s515, 256, 64, 4
        $region56: #{tpu_custom_call.1} parent=51 // pred_fallthru
          _
        // Predicated region
        $region57: #{tpu_custom_call.1} parent=51 // pred_check
          %p531 = pneg %p243
        $region58: #{tpu_custom_call.1} parent=51 // pred_check_branch
          %533 = sbr.rel (%p531) target = $region60
        $region59: #{tpu_custom_call.1} parent=51 // pred_region
          %s534 = sand.u32 %s29, 1
          %s535 = scalar_lea.sflag [#allocation5], %s534
          %s536 = sand.u32 %s233, 1
          %s537 = smul.addr %s536, 32
          %s538 = scalar_lea.vmem [#allocation19], %s537
          %s540 = ssub.s32 512, 512
          %541 = vsyncadd %s535, %s540
          %s542 = smul.addr %s29, 64
          %s543 = scalar_lea.hbm %s9, %s542
          %s544 = sshll.u32 %s538, 4
          %s545 = int_to_ptr.vmem [resolvable:$true] %s544
          %550 = dma.hbm_to_vmem [thread:$0]  %s543, 512, %s545, %s535, 256, 64, 4
        $region60: #{tpu_custom_call.1} parent=51 // pred_fallthru
          _
        // Predicated region
        $region61: #{tpu_custom_call.1} parent=51 // pred_check
          %p551 = pneg %p269
        $region62: #{tpu_custom_call.1} parent=51 // pred_check_branch
          %553 = sbr.rel (%p551) target = $region64
        $region63: #{tpu_custom_call.1} parent=51 // pred_region
          %s554 = sand.u32 %s29, 1
          %s555 = scalar_lea.sflag [#allocation5], %s554
          %s556 = sand.u32 %s259, 1
          %s557 = scalar_lea.vmem [#allocation20], %s556
          %s559 = ssub.s32 16, 16
          %560 = vsyncadd %s555, %s559
          %s561 = smul.addr %s29, 16
          %s562 = scalar_lea.hbm %s10, %s561
          %s564 = sshll.u32 %s557, 4
          %s565 = int_to_ptr.vmem [resolvable:$true] %s564
          %567 = dma.hbm_to_vmem [thread:$0]  %s562, 16, %s565, %s555
        $region64: #{tpu_custom_call.1} parent=51 // pred_fallthru
          _
        // Predicated region
        $region65: #{tpu_custom_call.1} parent=51 // pred_check
          %p568 = pneg %p295
        $region66: #{tpu_custom_call.1} parent=51 // pred_check_branch
          %570 = sbr.rel (%p568) target = $region68
        $region67: #{tpu_custom_call.1} parent=51 // pred_region
          %s571 = sand.u32 %s29, 1
          %s572 = scalar_lea.sflag [#allocation5], %s571
          %s573 = sand.u32 %s285, 1
          %s574 = smul.addr %s573, 64
          %s575 = scalar_lea.vmem [#allocation21], %s574
          %s576 = smul.u32 16, %s29
          %s578 = ssub.s32 1024, 1024
          %579 = vsyncadd %s572, %s578
          %s580 = smul.addr %s576, 64
          %s581 = scalar_lea.hbm %s11, %s580
          %s582 = sshll.u32 %s575, 4
          %s583 = int_to_ptr.vmem [resolvable:$true] %s582
          %588 = dma.hbm_to_vmem [thread:$0]  %s581, 1024, %s583, %s572, 64, 64, 4
        $region68: #{tpu_custom_call.1} parent=51 // pred_fallthru
          _
      $region52: #{tpu_custom_call.1} parent=5 // pred_fallthru
        _
      %p589 = scmp.le.s32.totalorder 1, %s29
      %p590 = scmp.lt.s32.totalorder %s29, 5
      %p591 = pnand %p589, %p590
      %p592 = pneg %p591
      // Predicated region
      $region69: #{tpu_custom_call.1} parent=5 // pred_check
        _
      $region70: #{tpu_custom_call.1} parent=5 // pred_check_branch
        %594 = sbr.rel (%p591) target = $region72
      $region71: #{tpu_custom_call.1} parent=5 // pred_region
        %s595 = ssub.s32 %s29, 1
        // Predicated region
        $region73: #{tpu_custom_call.1} parent=71 // pred_check
          %p596 = pneg %p50
        $region74: #{tpu_custom_call.1} parent=71 // pred_check_branch
          %598 = sbr.rel (%p596) target = $region76
        $region75: #{tpu_custom_call.1} parent=71 // pred_region
          %599 = dma.done [#allocation5], 128
        $region76: #{tpu_custom_call.1} parent=71 // pred_fallthru
          _
        // Predicated region
        $region77: #{tpu_custom_call.1} parent=71 // pred_check
          %p600 = pneg %p71
        $region78: #{tpu_custom_call.1} parent=71 // pred_check_branch
          %602 = sbr.rel (%p600) target = $region80
        $region79: #{tpu_custom_call.1} parent=71 // pred_region
          %603 = dma.done [#allocation8], 128
        $region80: #{tpu_custom_call.1} parent=71 // pred_fallthru
          _
        // Predicated region
        $region81: #{tpu_custom_call.1} parent=71 // pred_check
          %p604 = pneg %p92
        $region82: #{tpu_custom_call.1} parent=71 // pred_check_branch
          %606 = sbr.rel (%p604) target = $region84
        $region83: #{tpu_custom_call.1} parent=71 // pred_region
          %607 = dma.done [#allocation8], 1024
        $region84: #{tpu_custom_call.1} parent=71 // pred_fallthru
          _
        // Predicated region
        $region85: #{tpu_custom_call.1} parent=71 // pred_check
          %p608 = pneg %p113
        $region86: #{tpu_custom_call.1} parent=71 // pred_check_branch
          %610 = sbr.rel (%p608) target = $region88
        $region87: #{tpu_custom_call.1} parent=71 // pred_region
          %611 = dma.done [#allocation11], 2048
        $region88: #{tpu_custom_call.1} parent=71 // pred_fallthru
          _
        // Predicated region
        $region89: #{tpu_custom_call.1} parent=71 // pred_check
          %p612 = pneg %p134
        $region90: #{tpu_custom_call.1} parent=71 // pred_check_branch
          %614 = sbr.rel (%p612) target = $region92
        $region91: #{tpu_custom_call.1} parent=71 // pred_region
          %615 = dma.done [#allocation11], 2048
        $region92: #{tpu_custom_call.1} parent=71 // pred_fallthru
          _
        // Predicated region
        $region93: #{tpu_custom_call.1} parent=71 // pred_check
          %p616 = pneg %p155
        $region94: #{tpu_custom_call.1} parent=71 // pred_check_branch
          %618 = sbr.rel (%p616) target = $region96
        $region95: #{tpu_custom_call.1} parent=71 // pred_region
          %619 = dma.done [#allocation14], 32
        $region96: #{tpu_custom_call.1} parent=71 // pred_fallthru
          _
        // Predicated region
        $region97: #{tpu_custom_call.1} parent=71 // pred_check
          %p620 = pneg %p176
        $region98: #{tpu_custom_call.1} parent=71 // pred_check_branch
          %622 = sbr.rel (%p620) target = $region100
        $region99: #{tpu_custom_call.1} parent=71 // pred_region
          %623 = dma.done [#allocation14], 16
        $region100: #{tpu_custom_call.1} parent=71 // pred_fallthru
          _
        // Predicated region
        $region101: #{tpu_custom_call.1} parent=71 // pred_check
          %p624 = pneg %p197
        $region102: #{tpu_custom_call.1} parent=71 // pred_check_branch
          %626 = sbr.rel (%p624) target = $region104
        $region103: #{tpu_custom_call.1} parent=71 // pred_region
          %627 = dma.done [#allocation17], 128
        $region104: #{tpu_custom_call.1} parent=71 // pred_fallthru
          _
        %s628 = sand.u32 %s34, 1
        %s629 = scalar_lea.sflag [#allocation5], %s628
        %s630 = sand.u32 %s210, 1
        %s631 = smul.addr %s630, 64
        %s632 = scalar_lea.vmem [#allocation18], %s631
        // Predicated region
        $region105: #{tpu_custom_call.1} parent=71 // pred_check
          %p633 = pneg %p223
        $region106: #{tpu_custom_call.1} parent=71 // pred_check_branch
          %635 = sbr.rel (%p633) target = $region108
        $region107: #{tpu_custom_call.1} parent=71 // pred_region
          %636 = dma.done %s629, 1024
        $region108: #{tpu_custom_call.1} parent=71 // pred_fallthru
          _
        %s637 = sand.u32 %s34, 1
        %s638 = scalar_lea.sflag [#allocation5], %s637
        %s639 = sand.u32 %s236, 1
        %s640 = smul.addr %s639, 32
        %s641 = scalar_lea.vmem [#allocation19], %s640
        // Predicated region
        $region109: #{tpu_custom_call.1} parent=71 // pred_check
          %p642 = pneg %p249
        $region110: #{tpu_custom_call.1} parent=71 // pred_check_branch
          %644 = sbr.rel (%p642) target = $region112
        $region111: #{tpu_custom_call.1} parent=71 // pred_region
          %645 = dma.done %s638, 512
        $region112: #{tpu_custom_call.1} parent=71 // pred_fallthru
          _
        %s646 = sand.u32 %s34, 1
        %s647 = scalar_lea.sflag [#allocation5], %s646
        %s648 = sand.u32 %s262, 1
        %s649 = scalar_lea.vmem [#allocation20], %s648
        // Predicated region
        $region113: #{tpu_custom_call.1} parent=71 // pred_check
          %p650 = pneg %p275
        $region114: #{tpu_custom_call.1} parent=71 // pred_check_branch
          %652 = sbr.rel (%p650) target = $region116
        $region115: #{tpu_custom_call.1} parent=71 // pred_region
          %653 = dma.done %s647, 16
        $region116: #{tpu_custom_call.1} parent=71 // pred_fallthru
          _
        %s654 = sand.u32 %s34, 1
        %s655 = scalar_lea.sflag [#allocation5], %s654
        %s656 = sand.u32 %s288, 1
        %s657 = smul.addr %s656, 64
        %s658 = scalar_lea.vmem [#allocation21], %s657
        // Predicated region
        $region117: #{tpu_custom_call.1} parent=71 // pred_check
          %p659 = pneg %p301
        $region118: #{tpu_custom_call.1} parent=71 // pred_check_branch
          %661 = sbr.rel (%p659) target = $region120
        $region119: #{tpu_custom_call.1} parent=71 // pred_region
          %662 = dma.done %s655, 1024
        $region120: #{tpu_custom_call.1} parent=71 // pred_fallthru
          _
        // Predicated region
        $region121: #{tpu_custom_call.1} parent=71 // pred_check
          %p663 = pneg %p322
        $region122: #{tpu_custom_call.1} parent=71 // pred_check_branch
          %665 = sbr.rel (%p663) target = $region124
        $region123: #{tpu_custom_call.1} parent=71 // pred_region
          %666 = dma.done [#allocation8], 16
        $region124: #{tpu_custom_call.1} parent=71 // pred_fallthru
          _
        %p667 = pneg %p50
        %p668 = pneg %p47
        %p669 = pneg %p71
        %p670 = pneg %p68
        %p671 = pneg %p92
        %p672 = pneg %p89
        %p673 = pneg %p113
        %p674 = pneg %p110
        %p675 = pneg %p134
        %p676 = pneg %p131
        %p677 = pneg %p155
        %p678 = pneg %p152
        %p679 = pneg %p176
        %p680 = pneg %p173
        %p681 = pneg %p197
        %p682 = pneg %p194
        %s683 = sand.u32 %s34, 1
        %s684 = scalar_lea.sflag [#allocation5], %s683
        %s685 = sand.u32 %s210, 1
        %s686 = smul.addr %s685, 64
        %s687 = scalar_lea.vmem [#allocation18], %s686
        %p688 = pneg %p223
        %p689 = pneg %p220
        %s690 = sand.u32 %s34, 1
        %s691 = scalar_lea.sflag [#allocation5], %s690
        %s692 = sand.u32 %s236, 1
        %s693 = smul.addr %s692, 32
        %s694 = scalar_lea.vmem [#allocation19], %s693
        %p695 = pneg %p249
        %p696 = pneg %p246
        %s697 = sand.u32 %s34, 1
        %s698 = scalar_lea.sflag [#allocation5], %s697
        %s699 = sand.u32 %s262, 1
        %s700 = scalar_lea.vmem [#allocation20], %s699
        %p701 = pneg %p275
        %p702 = pneg %p272
        %s703 = sand.u32 %s34, 1
        %s704 = scalar_lea.sflag [#allocation5], %s703
        %s705 = sand.u32 %s288, 1
        %s706 = smul.addr %s705, 64
        %s707 = scalar_lea.vmem [#allocation21], %s706
        %p708 = pneg %p301
        %p709 = pneg %p298
        %p710 = pneg %p322
        %p711 = pneg %p319
        %p712 = pneg %p343
        %p713 = pneg %p340
        %p714 = pneg %p364
        %p715 = pneg %p361
        %p716 = pneg %p385
        %p717 = pneg %p382
        %s718 = smul.u32 16, %s34
        %p720 = scmp.eq.s32.totalorder %s34, 0
        // Predicated region
        $region125: #{tpu_custom_call.1} parent=71 // pred_check
          %p721 = pneg %p720
        $region126: #{tpu_custom_call.1} parent=71 // pred_check_branch
          %723 = sbr.rel (%p721) target = $region128
        $region127: #{tpu_custom_call.1} parent=71 // pred_region
          %v724 = vld [vmem:[#allocation4] sm:$0xff]
          %v725 = vld [vmem:[#allocation9] sm:$0xff]
          %v726 = vld [vmem:[#allocation9 + $0x8] sm:$0xff]
          %v727 = vld [vmem:[#allocation9 + $0x10] sm:$0xff]
          %v728 = vld [vmem:[#allocation9 + $0x18] sm:$0xff]
          %v729 = vld [vmem:[#allocation9 + $0x20] sm:$0xff]
          %v730 = vld [vmem:[#allocation9 + $0x28] sm:$0xff]
          %v731 = vld [vmem:[#allocation9 + $0x30] sm:$0xff]
          %v732 = vld [vmem:[#allocation9 + $0x38] sm:$0xff]
          %v733 = vld [vmem:[#allocation13] sm:$0x1]
          %v734 = vlaneseq
          %v735 = vshrl.u32 %v734, 7
          %v736 = vsub.s32 0, %v735
          %v737 = vrot.slane %v733, %v736
          %vm738 = vcmask 523264
          %v740 = vsel %vm738, %v724, 0
          %742 = vmatprep.subr.mxu0 0.0
          %743 = vmatpush1.msra.mxu0 %v725
          %744 = vmatprep.subr.mxu0 0.0
          %745 = vmatpush1.msra.mxu0 %v726
          %746 = vmatprep.subr.mxu0 0.0
          %747 = vmatpush1.msra.mxu0 %v727
          %748 = vmatprep.subr.mxu0 0.0
          %749 = vmatpush1.msra.mxu0 %v728
          %750 = vmatprep.subr.mxu0 0.0
          %751 = vmatpush1.msra.mxu0 %v729
          %752 = vmatprep.subr.mxu0 0.0
          %753 = vmatpush1.msra.mxu0 %v730
          %754 = vmatprep.subr.mxu0 0.0
          %755 = vmatpush1.msra.mxu0 %v731
          %756 = vmatprep.subr.mxu0 0.0
          %757 = vmatpush1.msra.mxu0 %v732
          %758 = vmatprep.subr.mxu0 0.0
          %759 = vmatpush1.msra.mxu0 0.0
          %760 = vmatprep.subr.mxu0 0.0
          %761 = vmatpush1.msra.mxu0 0.0
          %762 = vmatprep.subr.mxu0 0.0
          %763 = vmatpush1.msra.mxu0 0.0
          %764 = vmatprep.subr.mxu0 0.0
          %765 = vmatpush1.msra.mxu0 0.0
          %766 = vmatprep.subr.mxu0 0.0
          %767 = vmatpush1.msra.mxu0 0.0
          %768 = vmatprep.subr.mxu0 0.0
          %769 = vmatpush1.msra.mxu0 0.0
          %770 = vmatprep.subr.mxu0 0.0
          %771 = vmatpush1.msra.mxu0 0.0
          %772 = vmatprep.subr.mxu0 0.0
          %773 = vmatpush1.msra.mxu0 0.0
          %774 = vmatprep.subr.mxu0 0.0
          %775 = vmatpush1.msra.mxu0 0.0
          %776 = vmatprep.subr.mxu0 0.0
          %777 = vmatpush1.msra.mxu0 0.0
          %778 = vmatprep.subr.mxu0 0.0
          %779 = vmatpush1.msra.mxu0 0.0
          %780 = vmatprep.subr.mxu0 0.0
          %781 = vmatpush1.msra.mxu0 0.0
          %782 = vmatprep.subr.mxu0 0.0
          %783 = vmatpush1.msra.mxu0 0.0
          %784 = vmatprep.subr.mxu0 0.0
          %785 = vmatpush1.msra.mxu0 0.0
          %786 = vmatprep.subr.mxu0 0.0
          %787 = vmatpush1.msra.mxu0 0.0
          %788 = vmatprep.subr.mxu0 0.0
          %789 = vmatpush1.msra.mxu0 0.0
          %790 = vmatprep.subr.mxu0 0.0
          %791 = vmatpush1.msra.mxu0 0.0
          %792 = vmatprep.subr.mxu0 0.0
          %793 = vmatpush1.msra.mxu0 0.0
          %794 = vmatprep.subr.mxu0 0.0
          %795 = vmatpush1.msra.mxu0 0.0
          %796 = vmatprep.subr.mxu0 0.0
          %797 = vmatpush1.msra.mxu0 0.0
          %798 = vmatprep.subr.mxu0 0.0
          %799 = vmatpush1.msra.mxu0 0.0
          %800 = vmatprep.subr.mxu0 0.0
          %801 = vmatpush1.msra.mxu0 0.0
          %802 = vmatprep.subr.mxu0 0.0
          %803 = vmatpush1.msra.mxu0 0.0
          %804 = vmatprep.subr.mxu0 0.0
          %805 = vmatpush1.msra.mxu0 0.0
          %806 = vmatprep.mubr.f32.mxu0 0.0
          %807 = vmatmul.mubr.f32.gmra.mrb[0].mxu0 %v740
          %v808 = vpop.f32.mrb[0].mxu0
          %v809 = vadd.f32 %v737, %v808
          %v810 = vpop.f32.mrb[0].mxu0
          %811 = vdwg.mxu0
          %v812 = vmax.f32 %v809, 0.0
          %v813 = vld [vmem:[#allocation10] sm:$0xff]
          %v814 = vld [vmem:[#allocation10 + $0x8] sm:$0xff]
          %v815 = vld [vmem:[#allocation10 + $0x10] sm:$0xff]
          %v816 = vld [vmem:[#allocation10 + $0x18] sm:$0xff]
          %v817 = vld [vmem:[#allocation10 + $0x20] sm:$0xff]
          %v818 = vld [vmem:[#allocation10 + $0x28] sm:$0xff]
          %v819 = vld [vmem:[#allocation10 + $0x30] sm:$0xff]
          %v820 = vld [vmem:[#allocation10 + $0x38] sm:$0xff]
          %v821 = vld [vmem:[#allocation10 + $0x40] sm:$0xff]
          %v822 = vld [vmem:[#allocation10 + $0x48] sm:$0xff]
          %v823 = vld [vmem:[#allocation10 + $0x50] sm:$0xff]
          %v824 = vld [vmem:[#allocation10 + $0x58] sm:$0xff]
          %v825 = vld [vmem:[#allocation10 + $0x60] sm:$0xff]
          %v826 = vld [vmem:[#allocation10 + $0x68] sm:$0xff]
          %v827 = vld [vmem:[#allocation10 + $0x70] sm:$0xff]
          %v828 = vld [vmem:[#allocation10 + $0x78] sm:$0xff]
          %v829 = vld [vmem:[#allocation13 + $0x1] sm:$0x1]
          %v830 = vlaneseq
          %v831 = vshrl.u32 %v830, 7
          %v832 = vsub.s32 0, %v831
          %v833 = vrot.slane %v829, %v832
          %834 = vmatprep.subr.mxu0 0.0
          %835 = vmatpush1.msra.mxu0 %v813
          %836 = vmatprep.subr.mxu0 0.0
          %837 = vmatpush1.msra.mxu0 %v814
          %838 = vmatprep.subr.mxu0 0.0
          %839 = vmatpush1.msra.mxu0 %v815
          %840 = vmatprep.subr.mxu0 0.0
          %841 = vmatpush1.msra.mxu0 %v816
          %842 = vmatprep.subr.mxu0 0.0
          %843 = vmatpush1.msra.mxu0 %v817
          %844 = vmatprep.subr.mxu0 0.0
          %845 = vmatpush1.msra.mxu0 %v818
          %846 = vmatprep.subr.mxu0 0.0
          %847 = vmatpush1.msra.mxu0 %v819
          %848 = vmatprep.subr.mxu0 0.0
          %849 = vmatpush1.msra.mxu0 %v820
          %850 = vmatprep.subr.mxu0 0.0
          %851 = vmatpush1.msra.mxu0 %v821
          %852 = vmatprep.subr.mxu0 0.0
          %853 = vmatpush1.msra.mxu0 %v822
          %854 = vmatprep.subr.mxu0 0.0
          %855 = vmatpush1.msra.mxu0 %v823
          %856 = vmatprep.subr.mxu0 0.0
          %857 = vmatpush1.msra.mxu0 %v824
          %858 = vmatprep.subr.mxu0 0.0
          %859 = vmatpush1.msra.mxu0 %v825
          %860 = vmatprep.subr.mxu0 0.0
          %861 = vmatpush1.msra.mxu0 %v826
          %862 = vmatprep.subr.mxu0 0.0
          %863 = vmatpush1.msra.mxu0 %v827
          %864 = vmatprep.subr.mxu0 0.0
          %865 = vmatpush1.msra.mxu0 %v828
          %866 = vmatprep.subr.mxu0 0.0
          %867 = vmatpush1.msra.mxu0 0.0
          %868 = vmatprep.subr.mxu0 0.0
          %869 = vmatpush1.msra.mxu0 0.0
          %870 = vmatprep.subr.mxu0 0.0
          %871 = vmatpush1.msra.mxu0 0.0
          %872 = vmatprep.subr.mxu0 0.0
          %873 = vmatpush1.msra.mxu0 0.0
          %874 = vmatprep.subr.mxu0 0.0
          %875 = vmatpush1.msra.mxu0 0.0
          %876 = vmatprep.subr.mxu0 0.0
          %877 = vmatpush1.msra.mxu0 0.0
          %878 = vmatprep.subr.mxu0 0.0
          %879 = vmatpush1.msra.mxu0 0.0
          %880 = vmatprep.subr.mxu0 0.0
          %881 = vmatpush1.msra.mxu0 0.0
          %882 = vmatprep.subr.mxu0 0.0
          %883 = vmatpush1.msra.mxu0 0.0
          %884 = vmatprep.subr.mxu0 0.0
          %885 = vmatpush1.msra.mxu0 0.0
          %886 = vmatprep.subr.mxu0 0.0
          %887 = vmatpush1.msra.mxu0 0.0
          %888 = vmatprep.subr.mxu0 0.0
          %889 = vmatpush1.msra.mxu0 0.0
          %890 = vmatprep.subr.mxu0 0.0
          %891 = vmatpush1.msra.mxu0 0.0
          %892 = vmatprep.subr.mxu0 0.0
          %893 = vmatpush1.msra.mxu0 0.0
          %894 = vmatprep.subr.mxu0 0.0
          %895 = vmatpush1.msra.mxu0 0.0
          %896 = vmatprep.subr.mxu0 0.0
          %897 = vmatpush1.msra.mxu0 0.0
          %898 = vmatprep.mubr.f32.mxu0 0.0
          %899 = vmatmul.mubr.f32.gmra.mrb[0].mxu0 %v812
          %v900 = vpop.f32.mrb[0].mxu0
          %v901 = vadd.f32 %v833, %v900
          %v902 = vpop.f32.mrb[0].mxu0
          %903 = vdwg.mxu0
          %v904 = vmax.f32 %v901, 0.0
          %v905 = vld [vmem:[#allocation12] sm:$0xff]
          %v906 = vld [vmem:[#allocation12 + $0x8] sm:$0xff]
          %v907 = vld [vmem:[#allocation12 + $0x10] sm:$0xff]
          %v908 = vld [vmem:[#allocation12 + $0x18] sm:$0xff]
          %v909 = vld [vmem:[#allocation12 + $0x20] sm:$0xff]
          %v910 = vld [vmem:[#allocation12 + $0x28] sm:$0xff]
          %v911 = vld [vmem:[#allocation12 + $0x30] sm:$0xff]
          %v912 = vld [vmem:[#allocation12 + $0x38] sm:$0xff]
          %v913 = vld [vmem:[#allocation12 + $0x40] sm:$0xff]
          %v914 = vld [vmem:[#allocation12 + $0x48] sm:$0xff]
          %v915 = vld [vmem:[#allocation12 + $0x50] sm:$0xff]
          %v916 = vld [vmem:[#allocation12 + $0x58] sm:$0xff]
          %v917 = vld [vmem:[#allocation12 + $0x60] sm:$0xff]
          %v918 = vld [vmem:[#allocation12 + $0x68] sm:$0xff]
          %v919 = vld [vmem:[#allocation12 + $0x70] sm:$0xff]
          %v920 = vld [vmem:[#allocation12 + $0x78] sm:$0xff]
          %v921 = vld [vmem:[#allocation15] sm:$0x1]
          %v923 = vlaneseq
          %v924 = vshrl.u32 %v923, 7
          %v925 = vsub.s32 0, %v924
          %v926 = vrot.slane %v921, %v925
          %928 = vmatprep.subr.mxu0 0.0
          %929 = vmatpush1.msra.mxu0 %v905
          %930 = vmatprep.subr.mxu0 0.0
          %931 = vmatpush1.msra.mxu0 %v906
          %932 = vmatprep.subr.mxu0 0.0
          %933 = vmatpush1.msra.mxu0 %v907
          %934 = vmatprep.subr.mxu0 0.0
          %935 = vmatpush1.msra.mxu0 %v908
          %936 = vmatprep.subr.mxu0 0.0
          %937 = vmatpush1.msra.mxu0 %v909
          %938 = vmatprep.subr.mxu0 0.0
          %939 = vmatpush1.msra.mxu0 %v910
          %940 = vmatprep.subr.mxu0 0.0
          %941 = vmatpush1.msra.mxu0 %v911
          %942 = vmatprep.subr.mxu0 0.0
          %943 = vmatpush1.msra.mxu0 %v912
          %944 = vmatprep.subr.mxu0 0.0
          %945 = vmatpush1.msra.mxu0 %v913
          %946 = vmatprep.subr.mxu0 0.0
          %947 = vmatpush1.msra.mxu0 %v914
          %948 = vmatprep.subr.mxu0 0.0
          %949 = vmatpush1.msra.mxu0 %v915
          %950 = vmatprep.subr.mxu0 0.0
          %951 = vmatpush1.msra.mxu0 %v916
          %952 = vmatprep.subr.mxu0 0.0
          %953 = vmatpush1.msra.mxu0 %v917
          %954 = vmatprep.subr.mxu0 0.0
          %955 = vmatpush1.msra.mxu0 %v918
          %956 = vmatprep.subr.mxu0 0.0
          %957 = vmatpush1.msra.mxu0 %v919
          %958 = vmatprep.subr.mxu0 0.0
          %959 = vmatpush1.msra.mxu0 %v920
          %960 = vmatprep.subr.mxu0 0.0
          %961 = vmatpush1.msra.mxu0 0.0
          %962 = vmatprep.subr.mxu0 0.0
          %963 = vmatpush1.msra.mxu0 0.0
          %964 = vmatprep.subr.mxu0 0.0
          %965 = vmatpush1.msra.mxu0 0.0
          %966 = vmatprep.subr.mxu0 0.0
          %967 = vmatpush1.msra.mxu0 0.0
          %968 = vmatprep.subr.mxu0 0.0
          %969 = vmatpush1.msra.mxu0 0.0
          %970 = vmatprep.subr.mxu0 0.0
          %971 = vmatpush1.msra.mxu0 0.0
          %972 = vmatprep.subr.mxu0 0.0
          %973 = vmatpush1.msra.mxu0 0.0
          %974 = vmatprep.subr.mxu0 0.0
          %975 = vmatpush1.msra.mxu0 0.0
          %976 = vmatprep.subr.mxu0 0.0
          %977 = vmatpush1.msra.mxu0 0.0
          %978 = vmatprep.subr.mxu0 0.0
          %979 = vmatpush1.msra.mxu0 0.0
          %980 = vmatprep.subr.mxu0 0.0
          %981 = vmatpush1.msra.mxu0 0.0
          %982 = vmatprep.subr.mxu0 0.0
          %983 = vmatpush1.msra.mxu0 0.0
          %984 = vmatprep.subr.mxu0 0.0
          %985 = vmatpush1.msra.mxu0 0.0
          %986 = vmatprep.subr.mxu0 0.0
          %987 = vmatpush1.msra.mxu0 0.0
          %988 = vmatprep.subr.mxu0 0.0
          %989 = vmatpush1.msra.mxu0 0.0
          %990 = vmatprep.subr.mxu0 0.0
          %991 = vmatpush1.msra.mxu0 0.0
          %992 = vmatprep.mubr.f32.mxu0 0.0
          %993 = vmatmul.mubr.f32.gmra.mrb[0].mxu0 %v904
          %v994 = vpop.f32.mrb[0].mxu0
          %v995 = vadd.f32 %v926, %v994
          %v996 = vpop.f32.mrb[0].mxu0
          %997 = vdwg.mxu0
          %v998 = vmul.f32 %v995, 1.442695
          %v999 = vpow.pop %v998
          %vm1000 = vcmask 130048
          %1001 = vst.msk [vmem:[#allocation23] sm:$0xff] %vm1000, %v995
          %1003 = vrot.lane.b32.xlu0 %v999, 112
          %v1004 = vpop.permute.xlu0 %1003
          %s1006 = scalar_lea.vmem [#allocation23], 8
          %1007 = vst.msk [vmem:[%s1006] sm:$0xff] %vm1000, %v1004
          %1009 = vrot.lane.b32.xlu0 %v995, 112
          %v1010 = vpop.permute.xlu0 %1009
          %s1012 = scalar_lea.vmem [#allocation23], 16
          %1013 = vst.msk [vmem:[%s1012] sm:$0xff] %vm1000, %v1010
          %v1014 = vld [vmem:[#allocation7] sm:$0xff]
          %v1015 = vrsqrt.pop %v999
          %v1016 = vmul.f32 %v999, %v1015
          %vm1017 = vcmp.eq.f32.partialorder %v999, inf
          %v1018 = vsel %vm1017, %v999, %v1016
          %vm1019 = vcmp.eq.f32.partialorder %v999, 0.0
          %v1020 = vand.u32 %v999, 2147483648
          %v1021 = vsel %vm1019, %v1020, %v1018
          %1023 = vrot.lane.b32.xlu0 %v1021, 112
          %v1024 = vpop.permute.xlu0 %1023
          %v1026 = vmul.f32 %v1014, %v1024
          %v1027 = vadd.f32 %v1026, %v995
          %v1028 = vsel %vm1000, %v1027, -inf
          %1029 = vmax.xlane.f32.xlu0 %v1028
          %v1030 = vpop.xlane.xlu0 %1029
          %v1031 = vsub.f32 %v1027, %v1030
          %v1032 = vmul.f32 %v1031, 1.442695
          %v1033 = vpow.pop %v1032
          %v1034 = vsel %vm1000, %v1033, 0.0
          %1035 = vadd.xlane.f32.xlu0 %v1034
          %v1036 = vpop.xlane.xlu0 %1035
          %v1037 = vrcp.pop %v1036
          %v1038 = vmul.f32 %v1033, %v1037
          %v1039 = vpack.c.bf16 %v1038, %v1038
          %v1040 = vld [vmem:[#allocation16] sm:$0xf]
          %v1041 = vld [vmem:[#allocation16 + $0x4] sm:$0xf]
          %v1044 = vunpack.c.l.b16 %v1040
          %v1045 = vunpack.c.l.b16 %v1041
          %v1046 = vpack.c.b16 %v1045, %v1044
          %v1049 = vsel %vm1000, %v1039, 0
          %1051 = vmatprep.subr.bf16.mxu0 0
          %1052 = vmatpush1.bf16.msra.mxu0 %v1046
          %1053 = vmatprep.subr.bf16.mxu0 0
          %1054 = vmatpush1.bf16.msra.mxu0 0
          %1055 = vmatprep.subr.bf16.mxu0 0
          %1056 = vmatpush1.bf16.msra.mxu0 0
          %1057 = vmatprep.subr.bf16.mxu0 0
          %1058 = vmatpush1.bf16.msra.mxu0 0
          %1059 = vmatprep.subr.bf16.mxu0 0
          %1060 = vmatpush1.bf16.msra.mxu0 0
          %1061 = vmatprep.subr.bf16.mxu0 0
          %1062 = vmatpush1.bf16.msra.mxu0 0
          %1063 = vmatprep.subr.bf16.mxu0 0
          %1064 = vmatpush1.bf16.msra.mxu0 0
          %1065 = vmatprep.subr.bf16.mxu0 0
          %1066 = vmatpush1.bf16.msra.mxu0 0
          %1067 = vmatprep.subr.bf16.mxu0 0
          %1068 = vmatpush1.bf16.msra.mxu0 0
          %1069 = vmatprep.subr.bf16.mxu0 0
          %1070 = vmatpush1.bf16.msra.mxu0 0
          %1071 = vmatprep.subr.bf16.mxu0 0
          %1072 = vmatpush1.bf16.msra.mxu0 0
          %1073 = vmatprep.subr.bf16.mxu0 0
          %1074 = vmatpush1.bf16.msra.mxu0 0
          %1075 = vmatprep.subr.bf16.mxu0 0
          %1076 = vmatpush1.bf16.msra.mxu0 0
          %1077 = vmatprep.subr.bf16.mxu0 0
          %1078 = vmatpush1.bf16.msra.mxu0 0
          %1079 = vmatprep.subr.bf16.mxu0 0
          %1080 = vmatpush1.bf16.msra.mxu0 0
          %1081 = vmatprep.subr.bf16.mxu0 0
          %1082 = vmatpush1.bf16.msra.mxu0 0
          %1083 = vmatprep.mubr.bf16.mxu0 0
          %1084 = vmatmul.mubr.bf16.gmra.mrb[0].mxu0 %v1049
          %v1085 = vpop.f32.mrb[0].mxu0
          %v1086 = vadd.f32 0.0, %v1085
          %v1087 = vpop.f32.mrb[0].mxu0
          %v1088 = vpop.f32.mrb[0].mxu0
          %v1089 = vpop.f32.mrb[0].mxu0
          %1090 = vdwg.mxu0
          %1091 = vmax.xlane.f32.xlu0 %v1086
          %v1092 = vpop.xlane.xlu0 %1091
          %v1093 = vsub.f32 %v1086, %v1092
          %v1094 = vmul.f32 %v1093, 1.442695
          %v1095 = vpow.pop %v1094
          %1096 = vadd.xlane.f32.xlu0 %v1095
          %v1097 = vpop.xlane.xlu0 %1096
          %v1098 = vrcp.pop %v1097
          %v1099 = vmul.f32 %v1095, %v1098
          %1100 = vst [vmem:[#allocation24] sm:$0xff] %v1099
          %v1101 = vpack.c.bf16 %v1099, %v1099
          %1102 = vst [vmem:[#allocation2] sm:$0xf] %v1101
          %v1103 = vpack.c.bf16 %v724, %v724
          %vm1104 = vcmask 519168
          %1105 = vst.msk [vmem:[#allocation3] sm:$0xf] %vm1104, %v1103
          %v1106 = vld [vmem:[#allocation22] sm:$0x1]
          %v1108 = vlaneseq
          %v1109 = vshrl.u32 %v1108, 7
          %v1110 = vsub.s32 0, %v1109
          %v1111 = vrot.slane %v1106, %v1110
          %v1113 = vadd.f32 %v1111, 0.0
          %1114 = vst [vmem:[#allocation26] sm:$0xff] %v1113
        $region128: #{tpu_custom_call.1} parent=71 // pred_fallthru
          _
        %v1115 = vld [vmem:[#allocation2] sm:$0xf]
        %v1116 = vld [vmem:[%s632] sm:$0xf]
        %v1117 = vld [vmem:[%s632 + $0x4] sm:$0xf]
        %v1118 = vld [vmem:[%s632 + $0x8] sm:$0xf]
        %v1119 = vld [vmem:[%s632 + $0xc] sm:$0xf]
        %v1120 = vld [vmem:[%s632 + $0x10] sm:$0xf]
        %v1121 = vld [vmem:[%s632 + $0x14] sm:$0xf]
        %v1122 = vld [vmem:[%s632 + $0x18] sm:$0xf]
        %v1123 = vld [vmem:[%s632 + $0x1c] sm:$0xf]
        %v1124 = vld [vmem:[%s632 + $0x20] sm:$0xf]
        %v1125 = vld [vmem:[%s632 + $0x24] sm:$0xf]
        %v1126 = vld [vmem:[%s632 + $0x28] sm:$0xf]
        %v1127 = vld [vmem:[%s632 + $0x2c] sm:$0xf]
        %v1128 = vld [vmem:[%s632 + $0x30] sm:$0xf]
        %v1129 = vld [vmem:[%s632 + $0x34] sm:$0xf]
        %v1130 = vld [vmem:[%s632 + $0x38] sm:$0xf]
        %v1131 = vld [vmem:[%s632 + $0x3c] sm:$0xf]
        %v1132 = vld [vmem:[#allocation3] sm:$0xf]
        %v1133 = vld [vmem:[%s641] sm:$0xf]
        %v1134 = vld [vmem:[%s641 + $0x4] sm:$0xf]
        %v1135 = vld [vmem:[%s641 + $0x8] sm:$0xf]
        %v1136 = vld [vmem:[%s641 + $0xc] sm:$0xf]
        %v1137 = vld [vmem:[%s641 + $0x10] sm:$0xf]
        %v1138 = vld [vmem:[%s641 + $0x14] sm:$0xf]
        %v1139 = vld [vmem:[%s641 + $0x18] sm:$0xf]
        %v1140 = vld [vmem:[%s641 + $0x1c] sm:$0xf]
        %v1149 = vunpack.c.l.b16 %v1133
        %v1150 = vunpack.c.l.b16 %v1134
        %v1151 = vunpack.c.l.b16 %v1135
        %v1152 = vunpack.c.l.b16 %v1136
        %v1153 = vunpack.c.l.b16 %v1137
        %v1154 = vunpack.c.l.b16 %v1138
        %v1155 = vunpack.c.l.b16 %v1139
        %v1156 = vunpack.c.l.b16 %v1140
        %v1157 = vpack.c.b16 %v1150, %v1149
        %v1158 = vpack.c.b16 %v1152, %v1151
        %v1159 = vpack.c.b16 %v1154, %v1153
        %v1160 = vpack.c.b16 %v1156, %v1155
        %vm1165 = vcmask 523264
        %v1167 = vsel %vm1165, %v1132, 0
        %1169 = vmatprep.subr.bf16.mxu0 0
        %1170 = vmatpush1.bf16.msra.mxu0 %v1157
        %1171 = vmatprep.subr.bf16.mxu0 0
        %1172 = vmatpush1.bf16.msra.mxu0 %v1158
        %1173 = vmatprep.subr.bf16.mxu0 0
        %1174 = vmatpush1.bf16.msra.mxu0 %v1159
        %1175 = vmatprep.subr.bf16.mxu0 0
        %1176 = vmatpush1.bf16.msra.mxu0 %v1160
        %1177 = vmatprep.subr.bf16.mxu0 0
        %1178 = vmatpush1.bf16.msra.mxu0 0
        %1179 = vmatprep.subr.bf16.mxu0 0
        %1180 = vmatpush1.bf16.msra.mxu0 0
        %1181 = vmatprep.subr.bf16.mxu0 0
        %1182 = vmatpush1.bf16.msra.mxu0 0
        %1183 = vmatprep.subr.bf16.mxu0 0
        %1184 = vmatpush1.bf16.msra.mxu0 0
        %1185 = vmatprep.subr.bf16.mxu0 0
        %1186 = vmatpush1.bf16.msra.mxu0 0
        %1187 = vmatprep.subr.bf16.mxu0 0
        %1188 = vmatpush1.bf16.msra.mxu0 0
        %1189 = vmatprep.subr.bf16.mxu0 0
        %1190 = vmatpush1.bf16.msra.mxu0 0
        %1191 = vmatprep.subr.bf16.mxu0 0
        %1192 = vmatpush1.bf16.msra.mxu0 0
        %1193 = vmatprep.subr.bf16.mxu0 0
        %1194 = vmatpush1.bf16.msra.mxu0 0
        %1195 = vmatprep.subr.bf16.mxu0 0
        %1196 = vmatpush1.bf16.msra.mxu0 0
        %1197 = vmatprep.subr.bf16.mxu0 0
        %1198 = vmatpush1.bf16.msra.mxu0 0
        %1199 = vmatprep.subr.bf16.mxu0 0
        %1200 = vmatpush1.bf16.msra.mxu0 0
        %1201 = vmatprep.mubr.bf16.mxu0 0
        %1202 = vmatmul.mubr.bf16.gmra.mrb[0].mxu0 %v1167
        %v1203 = vpop.f32.mrb[0].mxu0
        %v1204 = vadd.f32 0.0, %v1203
        %v1205 = vpop.f32.mrb[0].mxu0
        %v1206 = vpop.f32.mrb[0].mxu0
        %v1207 = vpop.f32.mrb[0].mxu0
        %1208 = vdwg.mxu0
        %v1225 = vunpack.c.l.b16 %v1116
        %v1226 = vunpack.c.l.b16 %v1117
        %v1227 = vunpack.c.l.b16 %v1118
        %v1228 = vunpack.c.l.b16 %v1119
        %v1229 = vunpack.c.l.b16 %v1120
        %v1230 = vunpack.c.l.b16 %v1121
        %v1231 = vunpack.c.l.b16 %v1122
        %v1232 = vunpack.c.l.b16 %v1123
        %v1233 = vunpack.c.l.b16 %v1124
        %v1234 = vunpack.c.l.b16 %v1125
        %v1235 = vunpack.c.l.b16 %v1126
        %v1236 = vunpack.c.l.b16 %v1127
        %v1237 = vunpack.c.l.b16 %v1128
        %v1238 = vunpack.c.l.b16 %v1129
        %v1239 = vunpack.c.l.b16 %v1130
        %v1240 = vunpack.c.l.b16 %v1131
        %v1241 = vpack.c.b16 %v1226, %v1225
        %v1242 = vpack.c.b16 %v1228, %v1227
        %v1243 = vpack.c.b16 %v1230, %v1229
        %v1244 = vpack.c.b16 %v1232, %v1231
        %v1245 = vpack.c.b16 %v1234, %v1233
        %v1246 = vpack.c.b16 %v1236, %v1235
        %v1247 = vpack.c.b16 %v1238, %v1237
        %v1248 = vpack.c.b16 %v1240, %v1239
        %1257 = vmatprep.subr.bf16.mxu0 0
        %1258 = vmatpush1.bf16.msra.mxu0 %v1241
        %1259 = vmatprep.subr.bf16.mxu0 0
        %1260 = vmatpush1.bf16.msra.mxu0 %v1242
        %1261 = vmatprep.subr.bf16.mxu0 0
        %1262 = vmatpush1.bf16.msra.mxu0 %v1243
        %1263 = vmatprep.subr.bf16.mxu0 0
        %1264 = vmatpush1.bf16.msra.mxu0 %v1244
        %1265 = vmatprep.subr.bf16.mxu0 0
        %1266 = vmatpush1.bf16.msra.mxu0 %v1245
        %1267 = vmatprep.subr.bf16.mxu0 0
        %1268 = vmatpush1.bf16.msra.mxu0 %v1246
        %1269 = vmatprep.subr.bf16.mxu0 0
        %1270 = vmatpush1.bf16.msra.mxu0 %v1247
        %1271 = vmatprep.subr.bf16.mxu0 0
        %1272 = vmatpush1.bf16.msra.mxu0 %v1248
        %1273 = vmatprep.subr.bf16.mxu0 0
        %1274 = vmatpush1.bf16.msra.mxu0 0
        %1275 = vmatprep.subr.bf16.mxu0 0
        %1276 = vmatpush1.bf16.msra.mxu0 0
        %1277 = vmatprep.subr.bf16.mxu0 0
        %1278 = vmatpush1.bf16.msra.mxu0 0
        %1279 = vmatprep.subr.bf16.mxu0 0
        %1280 = vmatpush1.bf16.msra.mxu0 0
        %1281 = vmatprep.subr.bf16.mxu0 0
        %1282 = vmatpush1.bf16.msra.mxu0 0
        %1283 = vmatprep.subr.bf16.mxu0 0
        %1284 = vmatpush1.bf16.msra.mxu0 0
        %1285 = vmatprep.subr.bf16.mxu0 0
        %1286 = vmatpush1.bf16.msra.mxu0 0
        %1287 = vmatprep.subr.bf16.mxu0 0
        %1288 = vmatpush1.bf16.msra.mxu0 0
        %1289 = vmatprep.mubr.bf16.mxu0 0
        %1290 = vmatmul.mubr.bf16.gmra.mrb[0].mxu0 %v1115
        %v1291 = vpop.f32.mrb[0].mxu0
        %v1292 = vadd.f32 %v1204, %v1291
        %v1293 = vpop.f32.mrb[0].mxu0
        %v1294 = vpop.f32.mrb[0].mxu0
        %v1295 = vpop.f32.mrb[0].mxu0
        %1296 = vdwg.mxu0
        %v1297 = vld [vmem:[%s649] sm:$0x1]
        %v1299 = vlaneseq
        %v1300 = vshrl.u32 %v1299, 7
        %v1301 = vsub.s32 0, %v1300
        %v1302 = vrot.slane %v1297, %v1301
        %v1304 = vadd.f32 %v1292, %v1302
        %v1305 = vtanh.pop %v1304
        %v1306 = vld [vmem:[#allocation26] sm:$0xff]
        %v1307 = vpack.c.bf16 %v1305, %v1305
        %v1308 = vld [vmem:[%s658] sm:$0xf]
        %v1309 = vld [vmem:[%s658 + $0x4] sm:$0xf]
        %v1310 = vld [vmem:[%s658 + $0x8] sm:$0xf]
        %v1311 = vld [vmem:[%s658 + $0xc] sm:$0xf]
        %v1312 = vld [vmem:[%s658 + $0x10] sm:$0xf]
        %v1313 = vld [vmem:[%s658 + $0x14] sm:$0xf]
        %v1314 = vld [vmem:[%s658 + $0x18] sm:$0xf]
        %v1315 = vld [vmem:[%s658 + $0x1c] sm:$0xf]
        %v1316 = vld [vmem:[%s658 + $0x20] sm:$0xf]
        %v1317 = vld [vmem:[%s658 + $0x24] sm:$0xf]
        %v1318 = vld [vmem:[%s658 + $0x28] sm:$0xf]
        %v1319 = vld [vmem:[%s658 + $0x2c] sm:$0xf]
        %v1320 = vld [vmem:[%s658 + $0x30] sm:$0xf]
        %v1321 = vld [vmem:[%s658 + $0x34] sm:$0xf]
        %v1322 = vld [vmem:[%s658 + $0x38] sm:$0xf]
        %v1323 = vld [vmem:[%s658 + $0x3c] sm:$0xf]
        %v1340 = vunpack.c.l.b16 %v1308
        %v1341 = vunpack.c.l.b16 %v1309
        %v1342 = vunpack.c.l.b16 %v1310
        %v1343 = vunpack.c.l.b16 %v1311
        %v1344 = vunpack.c.l.b16 %v1312
        %v1345 = vunpack.c.l.b16 %v1313
        %v1346 = vunpack.c.l.b16 %v1314
        %v1347 = vunpack.c.l.b16 %v1315
        %v1348 = vunpack.c.l.b16 %v1316
        %v1349 = vunpack.c.l.b16 %v1317
        %v1350 = vunpack.c.l.b16 %v1318
        %v1351 = vunpack.c.l.b16 %v1319
        %v1352 = vunpack.c.l.b16 %v1320
        %v1353 = vunpack.c.l.b16 %v1321
        %v1354 = vunpack.c.l.b16 %v1322
        %v1355 = vunpack.c.l.b16 %v1323
        %v1356 = vpack.c.b16 %v1341, %v1340
        %v1357 = vpack.c.b16 %v1343, %v1342
        %v1358 = vpack.c.b16 %v1345, %v1344
        %v1359 = vpack.c.b16 %v1347, %v1346
        %v1360 = vpack.c.b16 %v1349, %v1348
        %v1361 = vpack.c.b16 %v1351, %v1350
        %v1362 = vpack.c.b16 %v1353, %v1352
        %v1363 = vpack.c.b16 %v1355, %v1354
        %1372 = vmatprep.subr.bf16.mxu0 0
        %1373 = vmatpush1.bf16.msra.mxu0 %v1356
        %1374 = vmatprep.subr.bf16.mxu0 0
        %1375 = vmatpush1.bf16.msra.mxu0 %v1357
        %1376 = vmatprep.subr.bf16.mxu0 0
        %1377 = vmatpush1.bf16.msra.mxu0 %v1358
        %1378 = vmatprep.subr.bf16.mxu0 0
        %1379 = vmatpush1.bf16.msra.mxu0 %v1359
        %1380 = vmatprep.subr.bf16.mxu0 0
        %1381 = vmatpush1.bf16.msra.mxu0 %v1360
        %1382 = vmatprep.subr.bf16.mxu0 0
        %1383 = vmatpush1.bf16.msra.mxu0 %v1361
        %1384 = vmatprep.subr.bf16.mxu0 0
        %1385 = vmatpush1.bf16.msra.mxu0 %v1362
        %1386 = vmatprep.subr.bf16.mxu0 0
        %1387 = vmatpush1.bf16.msra.mxu0 %v1363
        %1388 = vmatprep.subr.bf16.mxu0 0
        %1389 = vmatpush1.bf16.msra.mxu0 0
        %1390 = vmatprep.subr.bf16.mxu0 0
        %1391 = vmatpush1.bf16.msra.mxu0 0
        %1392 = vmatprep.subr.bf16.mxu0 0
        %1393 = vmatpush1.bf16.msra.mxu0 0
        %1394 = vmatprep.subr.bf16.mxu0 0
        %1395 = vmatpush1.bf16.msra.mxu0 0
        %1396 = vmatprep.subr.bf16.mxu0 0
        %1397 = vmatpush1.bf16.msra.mxu0 0
        %1398 = vmatprep.subr.bf16.mxu0 0
        %1399 = vmatpush1.bf16.msra.mxu0 0
        %1400 = vmatprep.subr.bf16.mxu0 0
        %1401 = vmatpush1.bf16.msra.mxu0 0
        %1402 = vmatprep.subr.bf16.mxu0 0
        %1403 = vmatpush1.bf16.msra.mxu0 0
        %1404 = vmatprep.mubr.bf16.mxu0 0
        %1405 = vmatmul.mubr.bf16.gmra.mrb[0].mxu0 %v1307
        %v1406 = vpop.f32.mrb[0].mxu0
        %v1407 = vadd.f32 0.0, %v1406
        %v1408 = vpop.f32.mrb[0].mxu0
        %v1409 = vpop.f32.mrb[0].mxu0
        %v1410 = vpop.f32.mrb[0].mxu0
        %1411 = vdwg.mxu0
        %v1412 = vadd.f32 %v1306, %v1407
        %1413 = vst [vmem:[#allocation26] sm:$0xff] %v1412
        // Predicated region
        $region129: #{tpu_custom_call.1} parent=71 // pred_check
          %p1414 = pneg %p340
        $region130: #{tpu_custom_call.1} parent=71 // pred_check_branch
          %1416 = sbr.rel (%p1414) target = $region132
        $region131: #{tpu_custom_call.1} parent=71 // pred_region
          %s1418 = ssub.s32 384, 384
          %1419 = vsyncadd [#allocation6], %s1418
          %s1420 = sshll.u32 [#allocation23], 4
          %s1421 = int_to_ptr.vmem [resolvable:$true] %s1420
          %1426 = dma.vmem_to_hbm [thread:$0]  %s1421, 384, %s13, [#allocation6], 128, 128, 8
        $region132: #{tpu_custom_call.1} parent=71 // pred_fallthru
          _
        // Predicated region
        $region133: #{tpu_custom_call.1} parent=71 // pred_check
          %p1427 = pneg %p361
        $region134: #{tpu_custom_call.1} parent=71 // pred_check_branch
          %1429 = sbr.rel (%p1427) target = $region136
        $region135: #{tpu_custom_call.1} parent=71 // pred_region
          %s1431 = ssub.s32 128, 128
          %1432 = vsyncadd [#allocation25], %s1431
          %s1434 = sshll.u32 [#allocation24], 4
          %s1435 = int_to_ptr.vmem [resolvable:$true] %s1434
          %1437 = dma.vmem_to_hbm [thread:$0]  %s1435, 128, %s14, [#allocation25]
        $region136: #{tpu_custom_call.1} parent=71 // pred_fallthru
          _
        // Predicated region
        $region137: #{tpu_custom_call.1} parent=71 // pred_check
          %p1438 = pneg %p382
        $region138: #{tpu_custom_call.1} parent=71 // pred_check_branch
          %1440 = sbr.rel (%p1438) target = $region140
        $region139: #{tpu_custom_call.1} parent=71 // pred_region
          %s1442 = ssub.s32 128, 128
          %1443 = vsyncadd [#allocation25], %s1442
          %s1445 = sshll.u32 [#allocation26], 4
          %s1446 = int_to_ptr.vmem [resolvable:$true] %s1445
          %1448 = dma.vmem_to_hbm [thread:$0]  %s1446, 128, %s15, [#allocation25]
        $region140: #{tpu_custom_call.1} parent=71 // pred_fallthru
          _
        // Predicated region
        $region141: #{tpu_custom_call.1} parent=71 // pred_check
          %p1449 = pneg %p340
        $region142: #{tpu_custom_call.1} parent=71 // pred_check_branch
          %1451 = sbr.rel (%p1449) target = $region144
        $region143: #{tpu_custom_call.1} parent=71 // pred_region
          %1452 = dma.done [#allocation6], 384
        $region144: #{tpu_custom_call.1} parent=71 // pred_fallthru
          _
        // Predicated region
        $region145: #{tpu_custom_call.1} parent=71 // pred_check
          %p1453 = pneg %p361
        $region146: #{tpu_custom_call.1} parent=71 // pred_check_branch
          %1455 = sbr.rel (%p1453) target = $region148
        $region147: #{tpu_custom_call.1} parent=71 // pred_region
          %1456 = dma.done [#allocation25], 128
        $region148: #{tpu_custom_call.1} parent=71 // pred_fallthru
          _
        // Predicated region
        $region149: #{tpu_custom_call.1} parent=71 // pred_check
          %p1457 = pneg %p382
        $region150: #{tpu_custom_call.1} parent=71 // pred_check_branch
          %1459 = sbr.rel (%p1457) target = $region152
        $region151: #{tpu_custom_call.1} parent=71 // pred_region
          %1460 = dma.done [#allocation25], 128
        $region152: #{tpu_custom_call.1} parent=71 // pred_fallthru
          _
      $region72: #{tpu_custom_call.1} parent=5 // pred_fallthru
        _
      %p1461 = scmp.le.s32.totalorder 2, %s29
      // Predicated region
      $region153: #{tpu_custom_call.1} parent=5 // pred_check
        %p1462 = pneg %p1461
      $region154: #{tpu_custom_call.1} parent=5 // pred_check_branch
        %1464 = sbr.rel (%p1462) target = $region156
      $region155: #{tpu_custom_call.1} parent=5 // pred_region
        %s1465 = ssub.s32 %s29, 2
      $region156: #{tpu_custom_call.1} parent=5 // pred_fallthru
        _
    $region6: #{tpu_custom_call.1} parent=1 // loop_footer
      %s33 = sadd.s32 1, %s29
    $region7: #{tpu_custom_call.1} parent=1 // loop_footer_branch
      %28 = sbr.rel target = $region3
    $region8: #{tpu_custom_call.1} parent=1 // loop_exit
      _
    %1466 = vsyncpa [#allocation5], 1
    %s1467 = scalar_lea.sflag [#allocation5], 1
    %1468 = vsyncpa %s1467, 1
    %1469 = vsyncpa [#allocation8], 1
    %1470 = vsyncpa [#allocation11], 1
    %1471 = vsyncpa [#allocation14], 1
    %1472 = vsyncpa [#allocation17], 1
    %1473 = vsyncpa [#allocation6], 1
    %s1474 = scalar_lea.sflag [#allocation6], 1
    %1475 = vsyncpa %s1474, 1
    %1476 = vsyncpa [#allocation25], 1

</llo_original>
